<compile_context>
chip_gen: v7x
topology: tpu7x:2x2x1
jax: 0.10.0
libtpu: 0.0.40
codegen_flags: <defaults>
</compile_context>

<pallas_src>
import functools

import jax
import jax.numpy as jnp
import numpy as np
from jax.experimental import pallas as pl
from jax.experimental.pallas import tpu as pltpu


# ------------------------------ VMEM budgeting ------------------------------

def _vmem_limit_bytes():
    """Scoped-VMEM limit per pallas_call, derived from the chip's physical VMEM."""
    try:
        phys = int(pltpu.get_tpu_info().vmem_capacity_bytes)
    except Exception:
        phys = 128 << 20          # v5e / v6e physical; v7x reports 64 MiB
    return int(max(16 << 20, min(phys // 2, 64 << 20)))


def _pick_m_tile(m, s_dim, k, h6, vmem_limit):
    """Largest divisor of m (multiple of 8) whose double-buffered blocks fit the budget."""
    weights = (s_dim * k * h6 + h6) * 4                   # packed W + bias
    per_row = 2 * 4 * (s_dim * k + h6)                    # dbl-buffered x block + out block
    cap = (int(vmem_limit * 0.6) - 2 * weights) // max(per_row, 1)
    cap = max(8, min(cap, 4096))
    for t in range(min(m, cap), 0, -1):
        if m % t == 0 and (t % 8 == 0 or t == m):
            return t
    return m


def _pick_t_chunk(t, bp, hid, vmem_limit):
    """Largest divisor of t (timesteps per grid step) fitting the VMEM budget."""
    per_step = 2 * 4 * bp * (3 * hid + hid)               # dbl-buffered gx block + out block
    weights = (2 * hid * 3 * hid + bp * hid + hid) * 4    # W_hh (dbl-buffered) + h scratch
    cap = (int(vmem_limit * 0.6) - weights) // max(per_step, 1)
    cap = max(1, min(cap, 64))                            # keep the unrolled loop sane
    # TODO(synk): pad/mask non-divisor T instead of degrading to small chunks.
    for c in range(min(t, cap), 0, -1):
        if t % c == 0:
            return c
    return 1


# ------------------- fused input projection (one GEMM, N = 6H) -------------------

def _proj_kernel(x_ref, w_ref, b_ref, o_ref):
    # x_ref: (S, tm, K) sources; w_ref: (S, K, 6H); b_ref: (1, 6H); o_ref: (2, tm, 3H)
    s_dim = x_ref.shape[0]
    h3 = o_ref.shape[-1]
    acc = jnp.dot(x_ref[0], w_ref[0], preferred_element_type=jnp.float32)
    for s in range(1, s_dim):
        acc = acc + jnp.dot(x_ref[s], w_ref[s], preferred_element_type=jnp.float32)
    acc = acc + b_ref[...]
    o_ref[0] = acc[:, :h3].astype(o_ref.dtype)    # forward-direction gates [r|z|n]
    o_ref[1] = acc[:, h3:].astype(o_ref.dtype)    # backward-direction gates [r|z|n]


def input_projection(src, w_packed, b_packed, *, vmem_limit):
    # src: (S, M, K); w_packed: (S, K, 6H); b_packed: (1, 6H) -> (2, M, 3H)
    s_dim, m, k = src.shape
    h6 = w_packed.shape[-1]
    h3 = h6 // 2
    tm = _pick_m_tile(m, s_dim, k, h6, vmem_limit)
    nm = m // tm
    return pl.pallas_call(
        _proj_kernel,
        out_shape=jax.ShapeDtypeStruct((2, m, h3), jnp.float32),
        grid_spec=pltpu.PrefetchScalarGridSpec(
            num_scalar_prefetch=0,
            grid=(nm,),
            in_specs=[
                pl.BlockSpec((s_dim, tm, k), lambda i: (0, i, 0)),
                pl.BlockSpec((s_dim, k, h6), lambda i: (0, 0, 0)),
                pl.BlockSpec((1, h6), lambda i: (0, 0)),
            ],
            out_specs=pl.BlockSpec((2, tm, h3), lambda i: (0, i, 0)),
        ),
        compiler_params=pltpu.CompilerParams(
            dimension_semantics=("parallel",),
            vmem_limit_bytes=vmem_limit),
    )(src, w_packed, b_packed)


# ----------------------- fused fwd/bwd GRU recurrence -----------------------

def _gru_rec_kernel(gx_ref, whh_ref, bhn_ref, out_ref, h_ref):
    # gx_ref:  (1, Tc, Bp, 3H)  precomputed [r|z|n] input projections (biases folded in)
    # whh_ref: (1, H, 3H)       fused hidden weights [W_hr.T | W_hz.T | W_hn.T]
    # bhn_ref: (1, 1, H)        b_hn (must stay separate: multiplied by r)
    # out_ref: (1, Tc, Bp, H)
    # h_ref:   (Bp, H) VMEM scratch carrying the hidden state across time chunks
    d = pl.program_id(0)          # 0 = forward direction, 1 = backward direction
    c = pl.program_id(1)
    tc = gx_ref.shape[1]
    hid = whh_ref.shape[1]

    @pl.when(c == 0)
    def _():
        h_ref[...] = jnp.zeros_like(h_ref)

    whh = whh_ref[0]              # (H, 3H) — hoisted out of the time loop
    bhn = bhn_ref[0]              # (1, H)

    def step(i, carry):
        # forward walks the chunk 0..Tc-1, backward walks it Tc-1..0
        ti = i + d * (tc - 1 - 2 * i)
        h_prev = h_ref[...]
        gh = jnp.dot(h_prev, whh, preferred_element_type=jnp.float32)   # (Bp, 3H)
        gx_t = gx_ref[0, ti]                                            # (Bp, 3H)
        rz = jax.nn.sigmoid(gx_t[:, :2 * hid] + gh[:, :2 * hid])        # one EUP pass
        r = rz[:, :hid]
        z = rz[:, hid:]
        n = jnp.tanh(gx_t[:, 2 * hid:] + r * (gh[:, 2 * hid:] + bhn))
        h_new = (1.0 - z) * n + z * h_prev
        h_ref[...] = h_new
        out_ref[0, ti] = h_new.astype(out_ref.dtype)
        return carry

    jax.lax.fori_loop(0, tc, step, 0, unroll=True)


def gru_recurrence(gx, whh, bhn, *, vmem_limit):
    # gx: (2, T, Bp, 3H); whh: (2, H, 3H); bhn: (2, 1, H) -> (2, T, Bp, H)
    _, t, bp, h3 = gx.shape
    hid = h3 // 3
    tc = _pick_t_chunk(t, bp, hid, vmem_limit)
    nc = t // tc

    def time_block(d, c):
        # forward: chunk c; backward: chunk nc-1-c (time reversal via index_map, no flip)
        return c + d * (nc - 1 - 2 * c)

    return pl.pallas_call(
        _gru_rec_kernel,
        out_shape=jax.ShapeDtypeStruct((2, t, bp, hid), jnp.float32),
        grid_spec=pltpu.PrefetchScalarGridSpec(
            num_scalar_prefetch=0,
            grid=(2, nc),
            in_specs=[
                pl.BlockSpec((1, tc, bp, h3),
                             lambda d, c: (d, time_block(d, c), 0, 0)),
                pl.BlockSpec((1, hid, h3), lambda d, c: (d, 0, 0)),
                pl.BlockSpec((1, 1, hid), lambda d, c: (d, 0, 0)),
            ],
            out_specs=pl.BlockSpec((1, tc, bp, hid),
                                   lambda d, c: (d, time_block(d, c), 0, 0)),
            scratch_shapes=[pltpu.VMEM((bp, hid), jnp.float32)],
        ),
        compiler_params=pltpu.CompilerParams(
            dimension_semantics=("parallel", "arbitrary"),
            vmem_limit_bytes=vmem_limit),
    )(gx, whh, bhn)


# ------------------------------ param packing ------------------------------

def _prep_layer_params(params, layer, hid, bn_scale, bn_shift):
    """Pack one layer's weights for the fused kernels.

    Returns:
      w_packed: (S, K, 6H)  columns = [d0_r | d0_z | d0_n | d1_r | d1_z | d1_n]
      b_packed: (1, 6H)     b_ih (+ BN fold at layer 0) (+ b_hr/b_hz folded in)
      whh:      (2, H, 3H)  fused hidden weights per direction
      bhn:      (2, 1, H)   b_hn per direction (stays in the recurrence)
    Layer > 0 keeps two K-sources (fwd / bwd halves of the previous layer output) so the
    recurrence output (2, T*Bp, H) is consumed directly, without a concat.
    """
    s_dim = 1 if layer == 0 else 2
    col_w = [[None] * 6 for _ in range(s_dim)]
    col_b = [None] * 6
    whh_list, bhn_list = [], []
    for d, suffix in enumerate(("", "_rev")):
        w_ih = params[f"w_ih_l{layer}{suffix}"]   # (3H, Din)
        w_hh = params[f"w_hh_l{layer}{suffix}"]   # (3H, H)
        b_ih = params[f"b_ih_l{layer}{suffix}"]   # (3H,)
        b_hh = params[f"b_hh_l{layer}{suffix}"]   # (3H,)
        wh_cols = []
        for g in range(3):                        # gate order r, z, n
            wg = w_ih[g * hid:(g + 1) * hid, :]   # (H, Din)
            bg = b_ih[g * hid:(g + 1) * hid]
            if layer == 0:
                bg = bg + wg @ bn_shift           # BN shift fold (uses unscaled W)
                wg = wg * bn_scale[None, :]       # BN scale fold
            if g < 2:                             # fold b_hr / b_hz into projection bias
                bg = bg + b_hh[g * hid:(g + 1) * hid]
            idx = d * 3 + g
            col_b[idx] = bg
            if layer == 0:
                col_w[0][idx] = wg.T              # (Din, H)
            else:
                col_w[0][idx] = wg[:, :hid].T     # fwd-source half (H, H)
                col_w[1][idx] = wg[:, hid:].T     # bwd-source half (H, H)
            wh_cols.append(w_hh[g * hid:(g + 1) * hid, :].T)        # (H, H)
        whh_list.append(jnp.concatenate(wh_cols, axis=1))           # (H, 3H)
        bhn_list.append(b_hh[2 * hid:].reshape(1, hid))             # (1, H)
    w_packed = jnp.stack(
        [jnp.concatenate(col_w[s], axis=1) for s in range(s_dim)], axis=0)
    b_packed = jnp.concatenate(col_b, axis=0).reshape(1, 6 * hid)
    whh = jnp.stack(whh_list, axis=0)
    bhn = jnp.stack(bhn_list, axis=0)
    return w_packed, b_packed, whh, bhn


# ------------------------------- full forward --------------------------------

def gru_encoder_forward(x, params, num_layers, hidden_size):
    # x: (B, T, input_size) float32 -> (B, T, hidden_size)
    bsz, seq, din = x.shape
    hid = hidden_size // 2
    bp = ((bsz + 7) // 8) * 8             # pad batch to a sublane multiple
    m = seq * bp
    vmem_limit = _vmem_limit_bytes()

    # eval-mode BatchNorm1d affine, folded into the layer-0 input projection
    eps = 1e-5
    bn_scale = params["bn_gamma"] * jax.lax.rsqrt(params["bn_var"] + eps)
    bn_shift = params["bn_beta"] - params["bn_mean"] * bn_scale

    xp = jnp.pad(x, ((0, bp - bsz), (0, 0), (0, 0)))
    src = jnp.transpose(xp, (1, 0, 2)).reshape(1, m, din)   # (S=1, T*Bp, Din), time-major

    h_all = None
    for layer in range(num_layers):
        w_packed, b_packed, whh, bhn = _prep_layer_params(params, layer, hid,
                                                          bn_scale, bn_shift)
        gx = input_projection(src, w_packed, b_packed, vmem_limit=vmem_limit)  # (2,M,3H)
        gx = gx.reshape(2, seq, bp, 3 * hid)
        h_all = gru_recurrence(gx, whh, bhn, vmem_limit=vmem_limit)            # (2,T,Bp,H)
        src = h_all.reshape(2, m, hid)                       # two K-sources for next layer
        # inter-layer GRU dropout: no-op in eval-mode forward

    # (2, T, Bp, H) -> (B, T, 2H), PyTorch bidirectional order [fwd | bwd]
    out = jnp.transpose(h_all[:, :, :bsz, :], (2, 1, 0, 3))
    return out.reshape(bsz, seq, 2 * hid)


# ------------------------------ pure-JAX reference ------------------------------

def gru_encoder_reference(x, params, num_layers, hidden_size):
    bsz, _, _ = x.shape
    hid = hidden_size // 2
    eps = 1e-5
    scale = params["bn_gamma"] * jax.lax.rsqrt(params["bn_var"] + eps)
    shift = params["bn_beta"] - params["bn_mean"] * scale
    layer_in = x * scale + shift
    for layer in range(num_layers):
        outs = []
        for suffix in ("", "_rev"):
            w_ih = params[f"w_ih_l{layer}{suffix}"]
            w_hh = params[f"w_hh_l{layer}{suffix}"]
            b_ih = params[f"b_ih_l{layer}{suffix}"]
            b_hh = params[f"b_hh_l{layer}{suffix}"]
            seq_in = layer_in if suffix == "" else jnp.flip(layer_in, axis=1)

            def step(h, x_t, w_ih=w_ih, w_hh=w_hh, b_ih=b_ih, b_hh=b_hh):
                gx = x_t @ w_ih.T + b_ih
                gh = h @ w_hh.T + b_hh
                r = jax.nn.sigmoid(gx[:, :hid] + gh[:, :hid])
                z = jax.nn.sigmoid(gx[:, hid:2 * hid] + gh[:, hid:2 * hid])
                n = jnp.tanh(gx[:, 2 * hid:] + r * gh[:, 2 * hid:])
                h_new = (1.0 - z) * n + z * h
                return h_new, h_new

            h0 = jnp.zeros((bsz, hid), jnp.float32)
            _, ys = jax.lax.scan(step, h0, jnp.transpose(seq_in, (1, 0, 2)))
            ys = jnp.transpose(ys, (1, 0, 2))
            if suffix == "_rev":
                ys = jnp.flip(ys, axis=1)
            outs.append(ys)
        layer_in = jnp.concatenate(outs, axis=-1)
    return layer_in


# --------------------------------- param init ------------------------------------

def init_params(key, input_size, hidden_size, num_layers):
    hid = hidden_size // 2  # per-direction hidden
    params = {}
    k = key

    def nxt():
        nonlocal k
        k, sub = jax.random.split(k)
        return sub

    params["bn_gamma"] = 1.0 + 0.1 * jax.random.normal(nxt(), (input_size,), jnp.float32)
    params["bn_beta"] = 0.1 * jax.random.normal(nxt(), (input_size,), jnp.float32)
    params["bn_mean"] = 0.1 * jax.random.normal(nxt(), (input_size,), jnp.float32)
    params["bn_var"] = jnp.abs(1.0 + 0.1 * jax.random.normal(nxt(), (input_size,), jnp.float32))

    scale = 1.0 / jnp.sqrt(jnp.float32(hid))
    for layer in range(num_layers):
        in_dim = input_size if layer == 0 else 2 * hid
        for suffix in ("", "_rev"):
            params[f"w_ih_l{layer}{suffix}"] = scale * jax.random.normal(
                nxt(), (3 * hid, in_dim), jnp.float32)
            params[f"w_hh_l{layer}{suffix}"] = scale * jax.random.normal(
                nxt(), (3 * hid, hid), jnp.float32)
            params[f"b_ih_l{layer}{suffix}"] = scale * jax.random.normal(
                nxt(), (3 * hid,), jnp.float32)
            params[f"b_hh_l{layer}{suffix}"] = scale * jax.random.normal(
                nxt(), (3 * hid,), jnp.float32)
    return params


if __name__ == "__main__":
    input_size = 16
    hidden_size = 32        # per-direction hidden = 16, bidirectional output = 32
    num_layers = 2
    dropout = 0.1           # inactive in eval-mode forward
    B, T = 2, 8

    key = jax.random.PRNGKey(0)
    k_params, k_x = jax.random.split(key)
    params = init_params(k_params, input_size, hidden_size, num_layers)
    x = jax.random.normal(k_x, (B, T, input_size), jnp.float32)

    fwd = jax.jit(functools.partial(gru_encoder_forward, num_layers=num_layers,
                                    hidden_size=hidden_size))
    out = fwd(x, params)
    jax.block_until_ready(out)

    assert out.shape == (B, T, hidden_size), out.shape
    assert out.dtype == jnp.float32

    # numerical sanity check vs a pure-JAX reference
    # (tolerance covers MXU default-precision f32 matmuls accumulated over the recurrence;
    #  any packing / indexing regression produces O(0.1-1) errors and is still caught)
    ref = gru_encoder_reference(x, params, num_layers, hidden_size)
    np.testing.assert_allclose(np.asarray(out), np.asarray(ref), rtol=0.0, atol=1e-2)

    print("KERNEL_OK")
</pallas_src>

<mosaic_0001>
module attributes {stable_mosaic.version = 11 : i64} {
  func.func @_proj_kernel(%arg0: i32, %arg1: memref<1x64x16xf32, #tpu.memory_space<vmem>>, %arg2: memref<1x16x96xf32, #tpu.memory_space<vmem>>, %arg3: memref<1x96xf32, #tpu.memory_space<vmem>>, %arg4: memref<2x64x48xf32, #tpu.memory_space<vmem>>) attributes {dimension_semantics = [#tpu.dimension_semantics<parallel>], iteration_bounds = array<i64: 1>, scalar_prefetch = 0 : i64, scratch_operands = 0 : i64, tpu.core_type = #tpu.core_type<tc>, window_params = [{transform_indices = @transform_0, window_bounds = array<i64: 1, 64, 16>}, {pipeline_mode = #tpu.pipeline_mode<synchronous>, transform_indices = @transform_1, window_bounds = array<i64: 1, 16, 96>}, {pipeline_mode = #tpu.pipeline_mode<synchronous>, transform_indices = @transform_2, window_bounds = array<i64: 1, 96>}, {transform_indices = @transform_3, window_bounds = array<i64: 2, 64, 48>}]} {
    %c0 = arith.constant 0 : index
    %c0_0 = arith.constant 0 : index
    %c0_1 = arith.constant 0 : index
    %0 = vector.load %arg1[%c0, %c0_0, %c0_1] : memref<1x64x16xf32, #tpu.memory_space<vmem>>, vector<1x64x16xf32>
    %1 = vector.shape_cast %0 : vector<1x64x16xf32> to vector<64x16xf32>
    %c0_2 = arith.constant 0 : index
    %c0_3 = arith.constant 0 : index
    %c0_4 = arith.constant 0 : index
    %2 = vector.load %arg2[%c0_2, %c0_3, %c0_4] : memref<1x16x96xf32, #tpu.memory_space<vmem>>, vector<1x16x96xf32>
    %3 = vector.shape_cast %2 : vector<1x16x96xf32> to vector<16x96xf32>
    %cst = arith.constant dense<0.000000e+00> : vector<64x96xf32>
    %4 = tpu.matmul %1, %3, %cst {dimension_numbers = #tpu.dot_dimension_numbers<[1], [0], [0], [1], [0, 0, 1, 1], [], []>} : vector<64x16xf32>, vector<16x96xf32>, vector<64x96xf32> -> vector<64x96xf32>
    %c0_5 = arith.constant 0 : index
    %c0_6 = arith.constant 0 : index
    %5 = vector.load %arg3[%c0_5, %c0_6] : memref<1x96xf32, #tpu.memory_space<vmem>>, vector<1x96xf32>
    %6 = vector.broadcast %5 : vector<1x96xf32> to vector<64x96xf32>
    %7 = arith.addf %4, %6 : vector<64x96xf32>
    %8 = vector.extract_strided_slice %7 {offsets = [0, 0], sizes = [64, 48], strides = [1, 1]} : vector<64x96xf32> to vector<64x48xf32>
    %c0_7 = arith.constant 0 : index
    %c0_8 = arith.constant 0 : index
    %c0_9 = arith.constant 0 : index
    %9 = vector.load %arg4[%c0_7, %c0_8, %c0_9] : memref<2x64x48xf32, #tpu.memory_space<vmem>>, vector<1x64x48xf32>
    %10 = vector.shape_cast %9 : vector<1x64x48xf32> to vector<64x48xf32>
    %11 = vector.shape_cast %8 : vector<64x48xf32> to vector<1x64x48xf32>
    tpu.vector_store %arg4[%c0_7, %c0_8, %c0_9], %11 {strides = array<i32>} : memref<2x64x48xf32, #tpu.memory_space<vmem>>, vector<1x64x48xf32>,
    %12 = vector.extract_strided_slice %7 {offsets = [0, 48], sizes = [64, 48], strides = [1, 1]} : vector<64x96xf32> to vector<64x48xf32>
    %c1 = arith.constant 1 : index
    %c0_10 = arith.constant 0 : index
    %c0_11 = arith.constant 0 : index
    %13 = vector.load %arg4[%c1, %c0_10, %c0_11] : memref<2x64x48xf32, #tpu.memory_space<vmem>>, vector<1x64x48xf32>
    %14 = vector.shape_cast %13 : vector<1x64x48xf32> to vector<64x48xf32>
    %15 = vector.shape_cast %12 : vector<64x48xf32> to vector<1x64x48xf32>
    tpu.vector_store %arg4[%c1, %c0_10, %c0_11], %15 {strides = array<i32>} : memref<2x64x48xf32, #tpu.memory_space<vmem>>, vector<1x64x48xf32>,
    return
  }
  func.func @transform_0(%arg0: i32) -> (i32, i32, i32) {
    %c0_i32 = arith.constant 0 : i32
    %c0_i32_0 = arith.constant 0 : i32
    %c0_i32_1 = arith.constant 0 : i32
    return %c0_i32, %arg0, %c0_i32_0 : i32, i32, i32
  }
  func.func @transform_1(%arg0: i32) -> (i32, i32, i32) {
    %c0_i32 = arith.constant 0 : i32
    %c0_i32_0 = arith.constant 0 : i32
    %c0_i32_1 = arith.constant 0 : i32
    %c0_i32_2 = arith.constant 0 : i32
    return %c0_i32, %c0_i32_0, %c0_i32_1 : i32, i32, i32
  }
  func.func @transform_2(%arg0: i32) -> (i32, i32) {
    %c0_i32 = arith.constant 0 : i32
    %c0_i32_0 = arith.constant 0 : i32
    %c0_i32_1 = arith.constant 0 : i32
    return %c0_i32, %c0_i32_0 : i32, i32
  }
  func.func @transform_3(%arg0: i32) -> (i32, i32, i32) {
    %c0_i32 = arith.constant 0 : i32
    %c0_i32_0 = arith.constant 0 : i32
    %c0_i32_1 = arith.constant 0 : i32
    return %c0_i32, %arg0, %c0_i32_0 : i32, i32, i32
  }
}

module attributes {stable_mosaic.version = 11 : i64} {
  func.func @_proj_kernel(%arg0: i32, %arg1: memref<2x64x16xf32, #tpu.memory_space<vmem>>, %arg2: memref<2x16x96xf32, #tpu.memory_space<vmem>>, %arg3: memref<1x96xf32, #tpu.memory_space<vmem>>, %arg4: memref<2x64x48xf32, #tpu.memory_space<vmem>>) attributes {dimension_semantics = [#tpu.dimension_semantics<parallel>], iteration_bounds = array<i64: 1>, scalar_prefetch = 0 : i64, scratch_operands = 0 : i64, tpu.core_type = #tpu.core_type<tc>, window_params = [{transform_indices = @transform_0, window_bounds = array<i64: 2, 64, 16>}, {pipeline_mode = #tpu.pipeline_mode<synchronous>, transform_indices = @transform_1, window_bounds = array<i64: 2, 16, 96>}, {pipeline_mode = #tpu.pipeline_mode<synchronous>, transform_indices = @transform_2, window_bounds = array<i64: 1, 96>}, {transform_indices = @transform_3, window_bounds = array<i64: 2, 64, 48>}]} {
    %c0 = arith.constant 0 : index
    %c0_0 = arith.constant 0 : index
    %c0_1 = arith.constant 0 : index
    %0 = vector.load %arg1[%c0, %c0_0, %c0_1] : memref<2x64x16xf32, #tpu.memory_space<vmem>>, vector<1x64x16xf32>
    %1 = vector.shape_cast %0 : vector<1x64x16xf32> to vector<64x16xf32>
    %c0_2 = arith.constant 0 : index
    %c0_3 = arith.constant 0 : index
    %c0_4 = arith.constant 0 : index
    %2 = vector.load %arg2[%c0_2, %c0_3, %c0_4] : memref<2x16x96xf32, #tpu.memory_space<vmem>>, vector<1x16x96xf32>
    %3 = vector.shape_cast %2 : vector<1x16x96xf32> to vector<16x96xf32>
    %cst = arith.constant dense<0.000000e+00> : vector<64x96xf32>
    %4 = tpu.matmul %1, %3, %cst {dimension_numbers = #tpu.dot_dimension_numbers<[1], [0], [0], [1], [0, 0, 1, 1], [], []>} : vector<64x16xf32>, vector<16x96xf32>, vector<64x96xf32> -> vector<64x96xf32>
    %c1 = arith.constant 1 : index
    %c0_5 = arith.constant 0 : index
    %c0_6 = arith.constant 0 : index
    %5 = vector.load %arg1[%c1, %c0_5, %c0_6] : memref<2x64x16xf32, #tpu.memory_space<vmem>>, vector<1x64x16xf32>
    %6 = vector.shape_cast %5 : vector<1x64x16xf32> to vector<64x16xf32>
    %c1_7 = arith.constant 1 : index
    %c0_8 = arith.constant 0 : index
    %c0_9 = arith.constant 0 : index
    %7 = vector.load %arg2[%c1_7, %c0_8, %c0_9] : memref<2x16x96xf32, #tpu.memory_space<vmem>>, vector<1x16x96xf32>
    %8 = vector.shape_cast %7 : vector<1x16x96xf32> to vector<16x96xf32>
    %cst_10 = arith.constant dense<0.000000e+00> : vector<64x96xf32>
    %9 = tpu.matmul %6, %8, %cst_10 {dimension_numbers = #tpu.dot_dimension_numbers<[1], [0], [0], [1], [0, 0, 1, 1], [], []>} : vector<64x16xf32>, vector<16x96xf32>, vector<64x96xf32> -> vector<64x96xf32>
    %10 = arith.addf %4, %9 : vector<64x96xf32>
    %c0_11 = arith.constant 0 : index
    %c0_12 = arith.constant 0 : index
    %11 = vector.load %arg3[%c0_11, %c0_12] : memref<1x96xf32, #tpu.memory_space<vmem>>, vector<1x96xf32>
    %12 = vector.broadcast %11 : vector<1x96xf32> to vector<64x96xf32>
    %13 = arith.addf %10, %12 : vector<64x96xf32>
    %14 = vector.extract_strided_slice %13 {offsets = [0, 0], sizes = [64, 48], strides = [1, 1]} : vector<64x96xf32> to vector<64x48xf32>
    %c0_13 = arith.constant 0 : index
    %c0_14 = arith.constant 0 : index
    %c0_15 = arith.constant 0 : index
    %15 = vector.load %arg4[%c0_13, %c0_14, %c0_15] : memref<2x64x48xf32, #tpu.memory_space<vmem>>, vector<1x64x48xf32>
    %16 = vector.shape_cast %15 : vector<1x64x48xf32> to vector<64x48xf32>
    %17 = vector.shape_cast %14 : vector<64x48xf32> to vector<1x64x48xf32>
    tpu.vector_store %arg4[%c0_13, %c0_14, %c0_15], %17 {strides = array<i32>} : memref<2x64x48xf32, #tpu.memory_space<vmem>>, vector<1x64x48xf32>,
    %18 = vector.extract_strided_slice %13 {offsets = [0, 48], sizes = [64, 48], strides = [1, 1]} : vector<64x96xf32> to vector<64x48xf32>
    %c1_16 = arith.constant 1 : index
    %c0_17 = arith.constant 0 : index
    %c0_18 = arith.constant 0 : index
    %19 = vector.load %arg4[%c1_16, %c0_17, %c0_18] : memref<2x64x48xf32, #tpu.memory_space<vmem>>, vector<1x64x48xf32>
    %20 = vector.shape_cast %19 : vector<1x64x48xf32> to vector<64x48xf32>
    %21 = vector.shape_cast %18 : vector<64x48xf32> to vector<1x64x48xf32>
    tpu.vector_store %arg4[%c1_16, %c0_17, %c0_18], %21 {strides = array<i32>} : memref<2x64x48xf32, #tpu.memory_space<vmem>>, vector<1x64x48xf32>,
    return
  }
  func.func @transform_0(%arg0: i32) -> (i32, i32, i32) {
    %c0_i32 = arith.constant 0 : i32
    %c0_i32_0 = arith.constant 0 : i32
    %c0_i32_1 = arith.constant 0 : i32
    return %c0_i32, %arg0, %c0_i32_0 : i32, i32, i32
  }
  func.func @transform_1(%arg0: i32) -> (i32, i32, i32) {
    %c0_i32 = arith.constant 0 : i32
    %c0_i32_0 = arith.constant 0 : i32
    %c0_i32_1 = arith.constant 0 : i32
    %c0_i32_2 = arith.constant 0 : i32
    return %c0_i32, %c0_i32_0, %c0_i32_1 : i32, i32, i32
  }
  func.func @transform_2(%arg0: i32) -> (i32, i32) {
    %c0_i32 = arith.constant 0 : i32
    %c0_i32_0 = arith.constant 0 : i32
    %c0_i32_1 = arith.constant 0 : i32
    return %c0_i32, %c0_i32_0 : i32, i32
  }
  func.func @transform_3(%arg0: i32) -> (i32, i32, i32) {
    %c0_i32 = arith.constant 0 : i32
    %c0_i32_0 = arith.constant 0 : i32
    %c0_i32_1 = arith.constant 0 : i32
    return %c0_i32, %arg0, %c0_i32_0 : i32, i32, i32
  }
}

module attributes {stable_mosaic.version = 11 : i64} {
  func.func @_gru_rec_kernel(%arg0: i32, %arg1: i32, %arg2: memref<1x8x8x48xf32, #tpu.memory_space<vmem>>, %arg3: memref<1x16x48xf32, #tpu.memory_space<vmem>>, %arg4: memref<1x1x16xf32, #tpu.memory_space<vmem>>, %arg5: memref<1x8x8x16xf32, #tpu.memory_space<vmem>>, %arg6: memref<8x16xf32, #tpu.memory_space<vmem>>) attributes {dimension_semantics = [#tpu.dimension_semantics<parallel>, #tpu.dimension_semantics<arbitrary>], iteration_bounds = array<i64: 2, 1>, scalar_prefetch = 0 : i64, scratch_operands = 1 : i64, tpu.core_type = #tpu.core_type<tc>, window_params = [{transform_indices = @transform_0, window_bounds = array<i64: 1, 8, 8, 48>}, {transform_indices = @transform_1, window_bounds = array<i64: 1, 16, 48>}, {transform_indices = @transform_2, window_bounds = array<i64: 1, 1, 16>}, {transform_indices = @transform_3, window_bounds = array<i64: 1, 8, 8, 16>}]} {
    %c0_i32 = arith.constant 0 : i32
    %0 = arith.cmpi eq, %arg1, %c0_i32 : i32
    %1 = arith.extui %0 : i1 to i32
    %c0_i32_0 = arith.constant 0 : i32
    %2 = arith.cmpi ne, %1, %c0_i32_0 : i32
    scf.if %2 {
      %cst_126 = arith.constant 0.000000e+00 : f32
      %295 = vector.broadcast %cst_126 : f32 to vector<8x16xf32>
      %c0_127 = arith.constant 0 : index
      %c0_128 = arith.constant 0 : index
      %296 = vector.load %arg6[%c0_127, %c0_128] : memref<8x16xf32, #tpu.memory_space<vmem>>, vector<8x16xf32>
      tpu.vector_store %arg6[%c0_127, %c0_128], %295 {strides = array<i32>} : memref<8x16xf32, #tpu.memory_space<vmem>>, vector<8x16xf32>,
    } else {
    }
    %c0 = arith.constant 0 : index
    %c0_1 = arith.constant 0 : index
    %c0_2 = arith.constant 0 : index
    %3 = vector.load %arg3[%c0, %c0_1, %c0_2] : memref<1x16x48xf32, #tpu.memory_space<vmem>>, vector<1x16x48xf32>
    %4 = vector.shape_cast %3 : vector<1x16x48xf32> to vector<16x48xf32>
    %c0_3 = arith.constant 0 : index
    %c0_4 = arith.constant 0 : index
    %c0_5 = arith.constant 0 : index
    %5 = vector.load %arg4[%c0_3, %c0_4, %c0_5] : memref<1x1x16xf32, #tpu.memory_space<vmem>>, vector<1x1x16xf32>
    %6 = vector.shape_cast %5 : vector<1x1x16xf32> to vector<1x16xf32>
    %c0_i32_6 = arith.constant 0 : i32
    %c2_i32 = arith.constant 2 : i32
    %7 = arith.muli %c2_i32, %c0_i32_6 : i32
    %c7_i32 = arith.constant 7 : i32
    %8 = arith.subi %c7_i32, %7 : i32
    %9 = arith.muli %arg0, %8 : i32
    %10 = arith.addi %c0_i32_6, %9 : i32
    %c0_7 = arith.constant 0 : index
    %c0_8 = arith.constant 0 : index
    %11 = vector.load %arg6[%c0_7, %c0_8] : memref<8x16xf32, #tpu.memory_space<vmem>>, vector<8x16xf32>
    %cst = arith.constant dense<0.000000e+00> : vector<8x48xf32>
    %12 = tpu.matmul %11, %4, %cst {dimension_numbers = #tpu.dot_dimension_numbers<[1], [0], [0], [1], [0, 0, 1, 1], [], []>} : vector<8x16xf32>, vector<16x48xf32>, vector<8x48xf32> -> vector<8x48xf32>
    %c0_9 = arith.constant 0 : index
    %13 = arith.index_cast %10 : i32 to index
    %c0_10 = arith.constant 0 : index
    %c0_11 = arith.constant 0 : index
    %14 = vector.load %arg2[%c0_9, %13, %c0_10, %c0_11] : memref<1x8x8x48xf32, #tpu.memory_space<vmem>>, vector<1x1x8x48xf32>
    %15 = vector.shape_cast %14 : vector<1x1x8x48xf32> to vector<8x48xf32>
    %16 = vector.extract_strided_slice %15 {offsets = [0, 0], sizes = [8, 32], strides = [1, 1]} : vector<8x48xf32> to vector<8x32xf32>
    %17 = vector.extract_strided_slice %12 {offsets = [0, 0], sizes = [8, 32], strides = [1, 1]} : vector<8x48xf32> to vector<8x32xf32>
    %18 = arith.addf %16, %17 : vector<8x32xf32>
    %19 = arith.negf %18 : vector<8x32xf32>
    %20 = math.exp %19 : vector<8x32xf32>
    %cst_12 = arith.constant 1.000000e+00 : f32
    %21 = vector.broadcast %cst_12 : f32 to vector<8x32xf32>
    %22 = arith.addf %21, %20 : vector<8x32xf32>
    %23 = arith.divf %21, %22 : vector<8x32xf32>
    %24 = vector.extract_strided_slice %23 {offsets = [0, 0], sizes = [8, 16], strides = [1, 1]} : vector<8x32xf32> to vector<8x16xf32>
    %25 = vector.extract_strided_slice %23 {offsets = [0, 16], sizes = [8, 16], strides = [1, 1]} : vector<8x32xf32> to vector<8x16xf32>
    %26 = vector.extract_strided_slice %15 {offsets = [0, 32], sizes = [8, 16], strides = [1, 1]} : vector<8x48xf32> to vector<8x16xf32>
    %27 = vector.extract_strided_slice %12 {offsets = [0, 32], sizes = [8, 16], strides = [1, 1]} : vector<8x48xf32> to vector<8x16xf32>
    %28 = vector.broadcast %6 : vector<1x16xf32> to vector<8x16xf32>
    %29 = arith.addf %27, %28 : vector<8x16xf32>
    %30 = arith.mulf %24, %29 : vector<8x16xf32>
    %31 = arith.addf %26, %30 : vector<8x16xf32>
    %32 = math.tanh %31 : vector<8x16xf32>
    %cst_13 = arith.constant 1.000000e+00 : f32
    %33 = vector.broadcast %cst_13 : f32 to vector<8x16xf32>
    %34 = arith.subf %33, %25 : vector<8x16xf32>
    %35 = arith.mulf %34, %32 : vector<8x16xf32>
    %36 = arith.mulf %25, %11 : vector<8x16xf32>
    %37 = arith.addf %35, %36 : vector<8x16xf32>
    %c0_14 = arith.constant 0 : index
    %c0_15 = arith.constant 0 : index
    %38 = vector.load %arg6[%c0_14, %c0_15] : memref<8x16xf32, #tpu.memory_space<vmem>>, vector<8x16xf32>
    tpu.vector_store %arg6[%c0_14, %c0_15], %37 {strides = array<i32>} : memref<8x16xf32, #tpu.memory_space<vmem>>, vector<8x16xf32>,
    %c0_16 = arith.constant 0 : index
    %39 = arith.index_cast %10 : i32 to index
    %c0_17 = arith.constant 0 : index
    %c0_18 = arith.constant 0 : index
    %40 = vector.load %arg5[%c0_16, %39, %c0_17, %c0_18] : memref<1x8x8x16xf32, #tpu.memory_space<vmem>>, vector<1x1x8x16xf32>
    %41 = vector.shape_cast %40 : vector<1x1x8x16xf32> to vector<8x16xf32>
    %42 = vector.shape_cast %37 : vector<8x16xf32> to vector<1x1x8x16xf32>
    tpu.vector_store %arg5[%c0_16, %39, %c0_17, %c0_18], %42 {strides = array<i32>} : memref<1x8x8x16xf32, #tpu.memory_space<vmem>>, vector<1x1x8x16xf32>,
    %c1_i32 = arith.constant 1 : i32
    %c2_i32_19 = arith.constant 2 : i32
    %43 = arith.muli %c2_i32_19, %c1_i32 : i32
    %c7_i32_20 = arith.constant 7 : i32
    %44 = arith.subi %c7_i32_20, %43 : i32
    %45 = arith.muli %arg0, %44 : i32
    %46 = arith.addi %c1_i32, %45 : i32
    %c0_21 = arith.constant 0 : index
    %c0_22 = arith.constant 0 : index
    %47 = vector.load %arg6[%c0_21, %c0_22] : memref<8x16xf32, #tpu.memory_space<vmem>>, vector<8x16xf32>
    %cst_23 = arith.constant dense<0.000000e+00> : vector<8x48xf32>
    %48 = tpu.matmul %47, %4, %cst_23 {dimension_numbers = #tpu.dot_dimension_numbers<[1], [0], [0], [1], [0, 0, 1, 1], [], []>} : vector<8x16xf32>, vector<16x48xf32>, vector<8x48xf32> -> vector<8x48xf32>
    %c0_24 = arith.constant 0 : index
    %49 = arith.index_cast %46 : i32 to index
    %c0_25 = arith.constant 0 : index
    %c0_26 = arith.constant 0 : index
    %50 = vector.load %arg2[%c0_24, %49, %c0_25, %c0_26] : memref<1x8x8x48xf32, #tpu.memory_space<vmem>>, vector<1x1x8x48xf32>
    %51 = vector.shape_cast %50 : vector<1x1x8x48xf32> to vector<8x48xf32>
    %52 = vector.extract_strided_slice %51 {offsets = [0, 0], sizes = [8, 32], strides = [1, 1]} : vector<8x48xf32> to vector<8x32xf32>
    %53 = vector.extract_strided_slice %48 {offsets = [0, 0], sizes = [8, 32], strides = [1, 1]} : vector<8x48xf32> to vector<8x32xf32>
    %54 = arith.addf %52, %53 : vector<8x32xf32>
    %55 = arith.negf %54 : vector<8x32xf32>
    %56 = math.exp %55 : vector<8x32xf32>
    %cst_27 = arith.constant 1.000000e+00 : f32
    %57 = vector.broadcast %cst_27 : f32 to vector<8x32xf32>
    %58 = arith.addf %57, %56 : vector<8x32xf32>
    %59 = arith.divf %57, %58 : vector<8x32xf32>
    %60 = vector.extract_strided_slice %59 {offsets = [0, 0], sizes = [8, 16], strides = [1, 1]} : vector<8x32xf32> to vector<8x16xf32>
    %61 = vector.extract_strided_slice %59 {offsets = [0, 16], sizes = [8, 16], strides = [1, 1]} : vector<8x32xf32> to vector<8x16xf32>
    %62 = vector.extract_strided_slice %51 {offsets = [0, 32], sizes = [8, 16], strides = [1, 1]} : vector<8x48xf32> to vector<8x16xf32>
    %63 = vector.extract_strided_slice %48 {offsets = [0, 32], sizes = [8, 16], strides = [1, 1]} : vector<8x48xf32> to vector<8x16xf32>
    %64 = vector.broadcast %6 : vector<1x16xf32> to vector<8x16xf32>
    %65 = arith.addf %63, %64 : vector<8x16xf32>
    %66 = arith.mulf %60, %65 : vector<8x16xf32>
    %67 = arith.addf %62, %66 : vector<8x16xf32>
    %68 = math.tanh %67 : vector<8x16xf32>
    %cst_28 = arith.constant 1.000000e+00 : f32
    %69 = vector.broadcast %cst_28 : f32 to vector<8x16xf32>
    %70 = arith.subf %69, %61 : vector<8x16xf32>
    %71 = arith.mulf %70, %68 : vector<8x16xf32>
    %72 = arith.mulf %61, %47 : vector<8x16xf32>
    %73 = arith.addf %71, %72 : vector<8x16xf32>
    %c0_29 = arith.constant 0 : index
    %c0_30 = arith.constant 0 : index
    %74 = vector.load %arg6[%c0_29, %c0_30] : memref<8x16xf32, #tpu.memory_space<vmem>>, vector<8x16xf32>
    tpu.vector_store %arg6[%c0_29, %c0_30], %73 {strides = array<i32>} : memref<8x16xf32, #tpu.memory_space<vmem>>, vector<8x16xf32>,
    %c0_31 = arith.constant 0 : index
    %75 = arith.index_cast %46 : i32 to index
    %c0_32 = arith.constant 0 : index
    %c0_33 = arith.constant 0 : index
    %76 = vector.load %arg5[%c0_31, %75, %c0_32, %c0_33] : memref<1x8x8x16xf32, #tpu.memory_space<vmem>>, vector<1x1x8x16xf32>
    %77 = vector.shape_cast %76 : vector<1x1x8x16xf32> to vector<8x16xf32>
    %78 = vector.shape_cast %73 : vector<8x16xf32> to vector<1x1x8x16xf32>
    tpu.vector_store %arg5[%c0_31, %75, %c0_32, %c0_33], %78 {strides = array<i32>} : memref<1x8x8x16xf32, #tpu.memory_space<vmem>>, vector<1x1x8x16xf32>,
    %c2_i32_34 = arith.constant 2 : i32
    %c2_i32_35 = arith.constant 2 : i32
    %79 = arith.muli %c2_i32_35, %c2_i32_34 : i32
    %c7_i32_36 = arith.constant 7 : i32
    %80 = arith.subi %c7_i32_36, %79 : i32
    %81 = arith.muli %arg0, %80 : i32
    %82 = arith.addi %c2_i32_34, %81 : i32
    %c0_37 = arith.constant 0 : index
    %c0_38 = arith.constant 0 : index
    %83 = vector.load %arg6[%c0_37, %c0_38] : memref<8x16xf32, #tpu.memory_space<vmem>>, vector<8x16xf32>
    %cst_39 = arith.constant dense<0.000000e+00> : vector<8x48xf32>
    %84 = tpu.matmul %83, %4, %cst_39 {dimension_numbers = #tpu.dot_dimension_numbers<[1], [0], [0], [1], [0, 0, 1, 1], [], []>} : vector<8x16xf32>, vector<16x48xf32>, vector<8x48xf32> -> vector<8x48xf32>
    %c0_40 = arith.constant 0 : index
    %85 = arith.index_cast %82 : i32 to index
    %c0_41 = arith.constant 0 : index
    %c0_42 = arith.constant 0 : index
    %86 = vector.load %arg2[%c0_40, %85, %c0_41, %c0_42] : memref<1x8x8x48xf32, #tpu.memory_space<vmem>>, vector<1x1x8x48xf32>
    %87 = vector.shape_cast %86 : vector<1x1x8x48xf32> to vector<8x48xf32>
    %88 = vector.extract_strided_slice %87 {offsets = [0, 0], sizes = [8, 32], strides = [1, 1]} : vector<8x48xf32> to vector<8x32xf32>
    %89 = vector.extract_strided_slice %84 {offsets = [0, 0], sizes = [8, 32], strides = [1, 1]} : vector<8x48xf32> to vector<8x32xf32>
    %90 = arith.addf %88, %89 : vector<8x32xf32>
    %91 = arith.negf %90 : vector<8x32xf32>
    %92 = math.exp %91 : vector<8x32xf32>
    %cst_43 = arith.constant 1.000000e+00 : f32
    %93 = vector.broadcast %cst_43 : f32 to vector<8x32xf32>
    %94 = arith.addf %93, %92 : vector<8x32xf32>
    %95 = arith.divf %93, %94 : vector<8x32xf32>
    %96 = vector.extract_strided_slice %95 {offsets = [0, 0], sizes = [8, 16], strides = [1, 1]} : vector<8x32xf32> to vector<8x16xf32>
    %97 = vector.extract_strided_slice %95 {offsets = [0, 16], sizes = [8, 16], strides = [1, 1]} : vector<8x32xf32> to vector<8x16xf32>
    %98 = vector.extract_strided_slice %87 {offsets = [0, 32], sizes = [8, 16], strides = [1, 1]} : vector<8x48xf32> to vector<8x16xf32>
    %99 = vector.extract_strided_slice %84 {offsets = [0, 32], sizes = [8, 16], strides = [1, 1]} : vector<8x48xf32> to vector<8x16xf32>
    %100 = vector.broadcast %6 : vector<1x16xf32> to vector<8x16xf32>
    %101 = arith.addf %99, %100 : vector<8x16xf32>
    %102 = arith.mulf %96, %101 : vector<8x16xf32>
    %103 = arith.addf %98, %102 : vector<8x16xf32>
    %104 = math.tanh %103 : vector<8x16xf32>
    %cst_44 = arith.constant 1.000000e+00 : f32
    %105 = vector.broadcast %cst_44 : f32 to vector<8x16xf32>
    %106 = arith.subf %105, %97 : vector<8x16xf32>
    %107 = arith.mulf %106, %104 : vector<8x16xf32>
    %108 = arith.mulf %97, %83 : vector<8x16xf32>
    %109 = arith.addf %107, %108 : vector<8x16xf32>
    %c0_45 = arith.constant 0 : index
    %c0_46 = arith.constant 0 : index
    %110 = vector.load %arg6[%c0_45, %c0_46] : memref<8x16xf32, #tpu.memory_space<vmem>>, vector<8x16xf32>
    tpu.vector_store %arg6[%c0_45, %c0_46], %109 {strides = array<i32>} : memref<8x16xf32, #tpu.memory_space<vmem>>, vector<8x16xf32>,
    %c0_47 = arith.constant 0 : index
    %111 = arith.index_cast %82 : i32 to index
    %c0_48 = arith.constant 0 : index
    %c0_49 = arith.constant 0 : index
    %112 = vector.load %arg5[%c0_47, %111, %c0_48, %c0_49] : memref<1x8x8x16xf32, #tpu.memory_space<vmem>>, vector<1x1x8x16xf32>
    %113 = vector.shape_cast %112 : vector<1x1x8x16xf32> to vector<8x16xf32>
    %114 = vector.shape_cast %109 : vector<8x16xf32> to vector<1x1x8x16xf32>
    tpu.vector_store %arg5[%c0_47, %111, %c0_48, %c0_49], %114 {strides = array<i32>} : memref<1x8x8x16xf32, #tpu.memory_space<vmem>>, vector<1x1x8x16xf32>,
    %c3_i32 = arith.constant 3 : i32
    %c2_i32_50 = arith.constant 2 : i32
    %115 = arith.muli %c2_i32_50, %c3_i32 : i32
    %c7_i32_51 = arith.constant 7 : i32
    %116 = arith.subi %c7_i32_51, %115 : i32
    %117 = arith.muli %arg0, %116 : i32
    %118 = arith.addi %c3_i32, %117 : i32
    %c0_52 = arith.constant 0 : index
    %c0_53 = arith.constant 0 : index
    %119 = vector.load %arg6[%c0_52, %c0_53] : memref<8x16xf32, #tpu.memory_space<vmem>>, vector<8x16xf32>
    %cst_54 = arith.constant dense<0.000000e+00> : vector<8x48xf32>
    %120 = tpu.matmul %119, %4, %cst_54 {dimension_numbers = #tpu.dot_dimension_numbers<[1], [0], [0], [1], [0, 0, 1, 1], [], []>} : vector<8x16xf32>, vector<16x48xf32>, vector<8x48xf32> -> vector<8x48xf32>
    %c0_55 = arith.constant 0 : index
    %121 = arith.index_cast %118 : i32 to index
    %c0_56 = arith.constant 0 : index
    %c0_57 = arith.constant 0 : index
    %122 = vector.load %arg2[%c0_55, %121, %c0_56, %c0_57] : memref<1x8x8x48xf32, #tpu.memory_space<vmem>>, vector<1x1x8x48xf32>
    %123 = vector.shape_cast %122 : vector<1x1x8x48xf32> to vector<8x48xf32>
    %124 = vector.extract_strided_slice %123 {offsets = [0, 0], sizes = [8, 32], strides = [1, 1]} : vector<8x48xf32> to vector<8x32xf32>
    %125 = vector.extract_strided_slice %120 {offsets = [0, 0], sizes = [8, 32], strides = [1, 1]} : vector<8x48xf32> to vector<8x32xf32>
    %126 = arith.addf %124, %125 : vector<8x32xf32>
    %127 = arith.negf %126 : vector<8x32xf32>
    %128 = math.exp %127 : vector<8x32xf32>
    %cst_58 = arith.constant 1.000000e+00 : f32
    %129 = vector.broadcast %cst_58 : f32 to vector<8x32xf32>
    %130 = arith.addf %129, %128 : vector<8x32xf32>
    %131 = arith.divf %129, %130 : vector<8x32xf32>
    %132 = vector.extract_strided_slice %131 {offsets = [0, 0], sizes = [8, 16], strides = [1, 1]} : vector<8x32xf32> to vector<8x16xf32>
    %133 = vector.extract_strided_slice %131 {offsets = [0, 16], sizes = [8, 16], strides = [1, 1]} : vector<8x32xf32> to vector<8x16xf32>
    %134 = vector.extract_strided_slice %123 {offsets = [0, 32], sizes = [8, 16], strides = [1, 1]} : vector<8x48xf32> to vector<8x16xf32>
    %135 = vector.extract_strided_slice %120 {offsets = [0, 32], sizes = [8, 16], strides = [1, 1]} : vector<8x48xf32> to vector<8x16xf32>
    %136 = vector.broadcast %6 : vector<1x16xf32> to vector<8x16xf32>
    %137 = arith.addf %135, %136 : vector<8x16xf32>
    %138 = arith.mulf %132, %137 : vector<8x16xf32>
    %139 = arith.addf %134, %138 : vector<8x16xf32>
    %140 = math.tanh %139 : vector<8x16xf32>
    %cst_59 = arith.constant 1.000000e+00 : f32
    %141 = vector.broadcast %cst_59 : f32 to vector<8x16xf32>
    %142 = arith.subf %141, %133 : vector<8x16xf32>
    %143 = arith.mulf %142, %140 : vector<8x16xf32>
    %144 = arith.mulf %133, %119 : vector<8x16xf32>
    %145 = arith.addf %143, %144 : vector<8x16xf32>
    %c0_60 = arith.constant 0 : index
    %c0_61 = arith.constant 0 : index
    %146 = vector.load %arg6[%c0_60, %c0_61] : memref<8x16xf32, #tpu.memory_space<vmem>>, vector<8x16xf32>
    tpu.vector_store %arg6[%c0_60, %c0_61], %145 {strides = array<i32>} : memref<8x16xf32, #tpu.memory_space<vmem>>, vector<8x16xf32>,
    %c0_62 = arith.constant 0 : index
    %147 = arith.index_cast %118 : i32 to index
    %c0_63 = arith.constant 0 : index
    %c0_64 = arith.constant 0 : index
    %148 = vector.load %arg5[%c0_62, %147, %c0_63, %c0_64] : memref<1x8x8x16xf32, #tpu.memory_space<vmem>>, vector<1x1x8x16xf32>
    %149 = vector.shape_cast %148 : vector<1x1x8x16xf32> to vector<8x16xf32>
    %150 = vector.shape_cast %145 : vector<8x16xf32> to vector<1x1x8x16xf32>
    tpu.vector_store %arg5[%c0_62, %147, %c0_63, %c0_64], %150 {strides = array<i32>} : memref<1x8x8x16xf32, #tpu.memory_space<vmem>>, vector<1x1x8x16xf32>,
    %c4_i32 = arith.constant 4 : i32
    %c2_i32_65 = arith.constant 2 : i32
    %151 = arith.muli %c2_i32_65, %c4_i32 : i32
    %c7_i32_66 = arith.constant 7 : i32
    %152 = arith.subi %c7_i32_66, %151 : i32
    %153 = arith.muli %arg0, %152 : i32
    %154 = arith.addi %c4_i32, %153 : i32
    %c0_67 = arith.constant 0 : index
    %c0_68 = arith.constant 0 : index
    %155 = vector.load %arg6[%c0_67, %c0_68] : memref<8x16xf32, #tpu.memory_space<vmem>>, vector<8x16xf32>
    %cst_69 = arith.constant dense<0.000000e+00> : vector<8x48xf32>
    %156 = tpu.matmul %155, %4, %cst_69 {dimension_numbers = #tpu.dot_dimension_numbers<[1], [0], [0], [1], [0, 0, 1, 1], [], []>} : vector<8x16xf32>, vector<16x48xf32>, vector<8x48xf32> -> vector<8x48xf32>
    %c0_70 = arith.constant 0 : index
    %157 = arith.index_cast %154 : i32 to index
    %c0_71 = arith.constant 0 : index
    %c0_72 = arith.constant 0 : index
    %158 = vector.load %arg2[%c0_70, %157, %c0_71, %c0_72] : memref<1x8x8x48xf32, #tpu.memory_space<vmem>>, vector<1x1x8x48xf32>
    %159 = vector.shape_cast %158 : vector<1x1x8x48xf32> to vector<8x48xf32>
    %160 = vector.extract_strided_slice %159 {offsets = [0, 0], sizes = [8, 32], strides = [1, 1]} : vector<8x48xf32> to vector<8x32xf32>
    %161 = vector.extract_strided_slice %156 {offsets = [0, 0], sizes = [8, 32], strides = [1, 1]} : vector<8x48xf32> to vector<8x32xf32>
    %162 = arith.addf %160, %161 : vector<8x32xf32>
    %163 = arith.negf %162 : vector<8x32xf32>
    %164 = math.exp %163 : vector<8x32xf32>
    %cst_73 = arith.constant 1.000000e+00 : f32
    %165 = vector.broadcast %cst_73 : f32 to vector<8x32xf32>
    %166 = arith.addf %165, %164 : vector<8x32xf32>
    %167 = arith.divf %165, %166 : vector<8x32xf32>
    %168 = vector.extract_strided_slice %167 {offsets = [0, 0], sizes = [8, 16], strides = [1, 1]} : vector<8x32xf32> to vector<8x16xf32>
    %169 = vector.extract_strided_slice %167 {offsets = [0, 16], sizes = [8, 16], strides = [1, 1]} : vector<8x32xf32> to vector<8x16xf32>
    %170 = vector.extract_strided_slice %159 {offsets = [0, 32], sizes = [8, 16], strides = [1, 1]} : vector<8x48xf32> to vector<8x16xf32>
    %171 = vector.extract_strided_slice %156 {offsets = [0, 32], sizes = [8, 16], strides = [1, 1]} : vector<8x48xf32> to vector<8x16xf32>
    %172 = vector.broadcast %6 : vector<1x16xf32> to vector<8x16xf32>
    %173 = arith.addf %171, %172 : vector<8x16xf32>
    %174 = arith.mulf %168, %173 : vector<8x16xf32>
    %175 = arith.addf %170, %174 : vector<8x16xf32>
    %176 = math.tanh %175 : vector<8x16xf32>
    %cst_74 = arith.constant 1.000000e+00 : f32
    %177 = vector.broadcast %cst_74 : f32 to vector<8x16xf32>
    %178 = arith.subf %177, %169 : vector<8x16xf32>
    %179 = arith.mulf %178, %176 : vector<8x16xf32>
    %180 = arith.mulf %169, %155 : vector<8x16xf32>
    %181 = arith.addf %179, %180 : vector<8x16xf32>
    %c0_75 = arith.constant 0 : index
    %c0_76 = arith.constant 0 : index
    %182 = vector.load %arg6[%c0_75, %c0_76] : memref<8x16xf32, #tpu.memory_space<vmem>>, vector<8x16xf32>
    tpu.vector_store %arg6[%c0_75, %c0_76], %181 {strides = array<i32>} : memref<8x16xf32, #tpu.memory_space<vmem>>, vector<8x16xf32>,
    %c0_77 = arith.constant 0 : index
    %183 = arith.index_cast %154 : i32 to index
    %c0_78 = arith.constant 0 : index
    %c0_79 = arith.constant 0 : index
    %184 = vector.load %arg5[%c0_77, %183, %c0_78, %c0_79] : memref<1x8x8x16xf32, #tpu.memory_space<vmem>>, vector<1x1x8x16xf32>
    %185 = vector.shape_cast %184 : vector<1x1x8x16xf32> to vector<8x16xf32>
    %186 = vector.shape_cast %181 : vector<8x16xf32> to vector<1x1x8x16xf32>
    tpu.vector_store %arg5[%c0_77, %183, %c0_78, %c0_79], %186 {strides = array<i32>} : memref<1x8x8x16xf32, #tpu.memory_space<vmem>>, vector<1x1x8x16xf32>,
    %c5_i32 = arith.constant 5 : i32
    %c2_i32_80 = arith.constant 2 : i32
    %187 = arith.muli %c2_i32_80, %c5_i32 : i32
    %c7_i32_81 = arith.constant 7 : i32
    %188 = arith.subi %c7_i32_81, %187 : i32
    %189 = arith.muli %arg0, %188 : i32
    %190 = arith.addi %c5_i32, %189 : i32
    %c0_82 = arith.constant 0 : index
    %c0_83 = arith.constant 0 : index
    %191 = vector.load %arg6[%c0_82, %c0_83] : memref<8x16xf32, #tpu.memory_space<vmem>>, vector<8x16xf32>
    %cst_84 = arith.constant dense<0.000000e+00> : vector<8x48xf32>
    %192 = tpu.matmul %191, %4, %cst_84 {dimension_numbers = #tpu.dot_dimension_numbers<[1], [0], [0], [1], [0, 0, 1, 1], [], []>} : vector<8x16xf32>, vector<16x48xf32>, vector<8x48xf32> -> vector<8x48xf32>
    %c0_85 = arith.constant 0 : index
    %193 = arith.index_cast %190 : i32 to index
    %c0_86 = arith.constant 0 : index
    %c0_87 = arith.constant 0 : index
    %194 = vector.load %arg2[%c0_85, %193, %c0_86, %c0_87] : memref<1x8x8x48xf32, #tpu.memory_space<vmem>>, vector<1x1x8x48xf32>
    %195 = vector.shape_cast %194 : vector<1x1x8x48xf32> to vector<8x48xf32>
    %196 = vector.extract_strided_slice %195 {offsets = [0, 0], sizes = [8, 32], strides = [1, 1]} : vector<8x48xf32> to vector<8x32xf32>
    %197 = vector.extract_strided_slice %192 {offsets = [0, 0], sizes = [8, 32], strides = [1, 1]} : vector<8x48xf32> to vector<8x32xf32>
    %198 = arith.addf %196, %197 : vector<8x32xf32>
    %199 = arith.negf %198 : vector<8x32xf32>
    %200 = math.exp %199 : vector<8x32xf32>
    %cst_88 = arith.constant 1.000000e+00 : f32
    %201 = vector.broadcast %cst_88 : f32 to vector<8x32xf32>
    %202 = arith.addf %201, %200 : vector<8x32xf32>
    %203 = arith.divf %201, %202 : vector<8x32xf32>
    %204 = vector.extract_strided_slice %203 {offsets = [0, 0], sizes = [8, 16], strides = [1, 1]} : vector<8x32xf32> to vector<8x16xf32>
    %205 = vector.extract_strided_slice %203 {offsets = [0, 16], sizes = [8, 16], strides = [1, 1]} : vector<8x32xf32> to vector<8x16xf32>
    %206 = vector.extract_strided_slice %195 {offsets = [0, 32], sizes = [8, 16], strides = [1, 1]} : vector<8x48xf32> to vector<8x16xf32>
    %207 = vector.extract_strided_slice %192 {offsets = [0, 32], sizes = [8, 16], strides = [1, 1]} : vector<8x48xf32> to vector<8x16xf32>
    %208 = vector.broadcast %6 : vector<1x16xf32> to vector<8x16xf32>
    %209 = arith.addf %207, %208 : vector<8x16xf32>
    %210 = arith.mulf %204, %209 : vector<8x16xf32>
    %211 = arith.addf %206, %210 : vector<8x16xf32>
    %212 = math.tanh %211 : vector<8x16xf32>
    %cst_89 = arith.constant 1.000000e+00 : f32
    %213 = vector.broadcast %cst_89 : f32 to vector<8x16xf32>
    %214 = arith.subf %213, %205 : vector<8x16xf32>
    %215 = arith.mulf %214, %212 : vector<8x16xf32>
    %216 = arith.mulf %205, %191 : vector<8x16xf32>
    %217 = arith.addf %215, %216 : vector<8x16xf32>
    %c0_90 = arith.constant 0 : index
    %c0_91 = arith.constant 0 : index
    %218 = vector.load %arg6[%c0_90, %c0_91] : memref<8x16xf32, #tpu.memory_space<vmem>>, vector<8x16xf32>
    tpu.vector_store %arg6[%c0_90, %c0_91], %217 {strides = array<i32>} : memref<8x16xf32, #tpu.memory_space<vmem>>, vector<8x16xf32>,
    %c0_92 = arith.constant 0 : index
    %219 = arith.index_cast %190 : i32 to index
    %c0_93 = arith.constant 0 : index
    %c0_94 = arith.constant 0 : index
    %220 = vector.load %arg5[%c0_92, %219, %c0_93, %c0_94] : memref<1x8x8x16xf32, #tpu.memory_space<vmem>>, vector<1x1x8x16xf32>
    %221 = vector.shape_cast %220 : vector<1x1x8x16xf32> to vector<8x16xf32>
    %222 = vector.shape_cast %217 : vector<8x16xf32> to vector<1x1x8x16xf32>
    tpu.vector_store %arg5[%c0_92, %219, %c0_93, %c0_94], %222 {strides = array<i32>} : memref<1x8x8x16xf32, #tpu.memory_space<vmem>>, vector<1x1x8x16xf32>,
    %c6_i32 = arith.constant 6 : i32
    %c2_i32_95 = arith.constant 2 : i32
    %223 = arith.muli %c2_i32_95, %c6_i32 : i32
    %c7_i32_96 = arith.constant 7 : i32
    %224 = arith.subi %c7_i32_96, %223 : i32
    %225 = arith.muli %arg0, %224 : i32
    %226 = arith.addi %c6_i32, %225 : i32
    %c0_97 = arith.constant 0 : index
    %c0_98 = arith.constant 0 : index
    %227 = vector.load %arg6[%c0_97, %c0_98] : memref<8x16xf32, #tpu.memory_space<vmem>>, vector<8x16xf32>
    %cst_99 = arith.constant dense<0.000000e+00> : vector<8x48xf32>
    %228 = tpu.matmul %227, %4, %cst_99 {dimension_numbers = #tpu.dot_dimension_numbers<[1], [0], [0], [1], [0, 0, 1, 1], [], []>} : vector<8x16xf32>, vector<16x48xf32>, vector<8x48xf32> -> vector<8x48xf32>
    %c0_100 = arith.constant 0 : index
    %229 = arith.index_cast %226 : i32 to index
    %c0_101 = arith.constant 0 : index
    %c0_102 = arith.constant 0 : index
    %230 = vector.load %arg2[%c0_100, %229, %c0_101, %c0_102] : memref<1x8x8x48xf32, #tpu.memory_space<vmem>>, vector<1x1x8x48xf32>
    %231 = vector.shape_cast %230 : vector<1x1x8x48xf32> to vector<8x48xf32>
    %232 = vector.extract_strided_slice %231 {offsets = [0, 0], sizes = [8, 32], strides = [1, 1]} : vector<8x48xf32> to vector<8x32xf32>
    %233 = vector.extract_strided_slice %228 {offsets = [0, 0], sizes = [8, 32], strides = [1, 1]} : vector<8x48xf32> to vector<8x32xf32>
    %234 = arith.addf %232, %233 : vector<8x32xf32>
    %235 = arith.negf %234 : vector<8x32xf32>
    %236 = math.exp %235 : vector<8x32xf32>
    %cst_103 = arith.constant 1.000000e+00 : f32
    %237 = vector.broadcast %cst_103 : f32 to vector<8x32xf32>
    %238 = arith.addf %237, %236 : vector<8x32xf32>
    %239 = arith.divf %237, %238 : vector<8x32xf32>
    %240 = vector.extract_strided_slice %239 {offsets = [0, 0], sizes = [8, 16], strides = [1, 1]} : vector<8x32xf32> to vector<8x16xf32>
    %241 = vector.extract_strided_slice %239 {offsets = [0, 16], sizes = [8, 16], strides = [1, 1]} : vector<8x32xf32> to vector<8x16xf32>
    %242 = vector.extract_strided_slice %231 {offsets = [0, 32], sizes = [8, 16], strides = [1, 1]} : vector<8x48xf32> to vector<8x16xf32>
    %243 = vector.extract_strided_slice %228 {offsets = [0, 32], sizes = [8, 16], strides = [1, 1]} : vector<8x48xf32> to vector<8x16xf32>
    %244 = vector.broadcast %6 : vector<1x16xf32> to vector<8x16xf32>
    %245 = arith.addf %243, %244 : vector<8x16xf32>
    %246 = arith.mulf %240, %245 : vector<8x16xf32>
    %247 = arith.addf %242, %246 : vector<8x16xf32>
    %248 = math.tanh %247 : vector<8x16xf32>
    %cst_104 = arith.constant 1.000000e+00 : f32
    %249 = vector.broadcast %cst_104 : f32 to vector<8x16xf32>
    %250 = arith.subf %249, %241 : vector<8x16xf32>
    %251 = arith.mulf %250, %248 : vector<8x16xf32>
    %252 = arith.mulf %241, %227 : vector<8x16xf32>
    %253 = arith.addf %251, %252 : vector<8x16xf32>
    %c0_105 = arith.constant 0 : index
    %c0_106 = arith.constant 0 : index
    %254 = vector.load %arg6[%c0_105, %c0_106] : memref<8x16xf32, #tpu.memory_space<vmem>>, vector<8x16xf32>
    tpu.vector_store %arg6[%c0_105, %c0_106], %253 {strides = array<i32>} : memref<8x16xf32, #tpu.memory_space<vmem>>, vector<8x16xf32>,
    %c0_107 = arith.constant 0 : index
    %255 = arith.index_cast %226 : i32 to index
    %c0_108 = arith.constant 0 : index
    %c0_109 = arith.constant 0 : index
    %256 = vector.load %arg5[%c0_107, %255, %c0_108, %c0_109] : memref<1x8x8x16xf32, #tpu.memory_space<vmem>>, vector<1x1x8x16xf32>
    %257 = vector.shape_cast %256 : vector<1x1x8x16xf32> to vector<8x16xf32>
    %258 = vector.shape_cast %253 : vector<8x16xf32> to vector<1x1x8x16xf32>
    tpu.vector_store %arg5[%c0_107, %255, %c0_108, %c0_109], %258 {strides = array<i32>} : memref<1x8x8x16xf32, #tpu.memory_space<vmem>>, vector<1x1x8x16xf32>,
    %c7_i32_110 = arith.constant 7 : i32
    %c2_i32_111 = arith.constant 2 : i32
    %259 = arith.muli %c2_i32_111, %c7_i32_110 : i32
    %c7_i32_112 = arith.constant 7 : i32
    %260 = arith.subi %c7_i32_112, %259 : i32
    %261 = arith.muli %arg0, %260 : i32
    %262 = arith.addi %c7_i32_110, %261 : i32
    %c0_113 = arith.constant 0 : index
    %c0_114 = arith.constant 0 : index
    %263 = vector.load %arg6[%c0_113, %c0_114] : memref<8x16xf32, #tpu.memory_space<vmem>>, vector<8x16xf32>
    %cst_115 = arith.constant dense<0.000000e+00> : vector<8x48xf32>
    %264 = tpu.matmul %263, %4, %cst_115 {dimension_numbers = #tpu.dot_dimension_numbers<[1], [0], [0], [1], [0, 0, 1, 1], [], []>} : vector<8x16xf32>, vector<16x48xf32>, vector<8x48xf32> -> vector<8x48xf32>
    %c0_116 = arith.constant 0 : index
    %265 = arith.index_cast %262 : i32 to index
    %c0_117 = arith.constant 0 : index
    %c0_118 = arith.constant 0 : index
    %266 = vector.load %arg2[%c0_116, %265, %c0_117, %c0_118] : memref<1x8x8x48xf32, #tpu.memory_space<vmem>>, vector<1x1x8x48xf32>
    %267 = vector.shape_cast %266 : vector<1x1x8x48xf32> to vector<8x48xf32>
    %268 = vector.extract_strided_slice %267 {offsets = [0, 0], sizes = [8, 32], strides = [1, 1]} : vector<8x48xf32> to vector<8x32xf32>
    %269 = vector.extract_strided_slice %264 {offsets = [0, 0], sizes = [8, 32], strides = [1, 1]} : vector<8x48xf32> to vector<8x32xf32>
    %270 = arith.addf %268, %269 : vector<8x32xf32>
    %271 = arith.negf %270 : vector<8x32xf32>
    %272 = math.exp %271 : vector<8x32xf32>
    %cst_119 = arith.constant 1.000000e+00 : f32
    %273 = vector.broadcast %cst_119 : f32 to vector<8x32xf32>
    %274 = arith.addf %273, %272 : vector<8x32xf32>
    %275 = arith.divf %273, %274 : vector<8x32xf32>
    %276 = vector.extract_strided_slice %275 {offsets = [0, 0], sizes = [8, 16], strides = [1, 1]} : vector<8x32xf32> to vector<8x16xf32>
    %277 = vector.extract_strided_slice %275 {offsets = [0, 16], sizes = [8, 16], strides = [1, 1]} : vector<8x32xf32> to vector<8x16xf32>
    %278 = vector.extract_strided_slice %267 {offsets = [0, 32], sizes = [8, 16], strides = [1, 1]} : vector<8x48xf32> to vector<8x16xf32>
    %279 = vector.extract_strided_slice %264 {offsets = [0, 32], sizes = [8, 16], strides = [1, 1]} : vector<8x48xf32> to vector<8x16xf32>
    %280 = vector.broadcast %6 : vector<1x16xf32> to vector<8x16xf32>
    %281 = arith.addf %279, %280 : vector<8x16xf32>
    %282 = arith.mulf %276, %281 : vector<8x16xf32>
    %283 = arith.addf %278, %282 : vector<8x16xf32>
    %284 = math.tanh %283 : vector<8x16xf32>
    %cst_120 = arith.constant 1.000000e+00 : f32
    %285 = vector.broadcast %cst_120 : f32 to vector<8x16xf32>
    %286 = arith.subf %285, %277 : vector<8x16xf32>
    %287 = arith.mulf %286, %284 : vector<8x16xf32>
    %288 = arith.mulf %277, %263 : vector<8x16xf32>
    %289 = arith.addf %287, %288 : vector<8x16xf32>
    %c0_121 = arith.constant 0 : index
    %c0_122 = arith.constant 0 : index
    %290 = vector.load %arg6[%c0_121, %c0_122] : memref<8x16xf32, #tpu.memory_space<vmem>>, vector<8x16xf32>
    tpu.vector_store %arg6[%c0_121, %c0_122], %289 {strides = array<i32>} : memref<8x16xf32, #tpu.memory_space<vmem>>, vector<8x16xf32>,
    %c0_123 = arith.constant 0 : index
    %291 = arith.index_cast %262 : i32 to index
    %c0_124 = arith.constant 0 : index
    %c0_125 = arith.constant 0 : index
    %292 = vector.load %arg5[%c0_123, %291, %c0_124, %c0_125] : memref<1x8x8x16xf32, #tpu.memory_space<vmem>>, vector<1x1x8x16xf32>
    %293 = vector.shape_cast %292 : vector<1x1x8x16xf32> to vector<8x16xf32>
    %294 = vector.shape_cast %289 : vector<8x16xf32> to vector<1x1x8x16xf32>
    tpu.vector_store %arg5[%c0_123, %291, %c0_124, %c0_125], %294 {strides = array<i32>} : memref<1x8x8x16xf32, #tpu.memory_space<vmem>>, vector<1x1x8x16xf32>,
    %c8_i32 = arith.constant 8 : i32
    return
  }
  func.func @transform_0(%arg0: i32, %arg1: i32) -> (i32, i32, i32, i32) {
    %c2_i32 = arith.constant 2 : i32
    %0 = arith.muli %c2_i32, %arg1 : i32
    %c0_i32 = arith.constant 0 : i32
    %1 = arith.subi %c0_i32, %0 : i32
    %2 = arith.muli %arg0, %1 : i32
    %3 = arith.addi %arg1, %2 : i32
    %c0_i32_0 = arith.constant 0 : i32
    %c0_i32_1 = arith.constant 0 : i32
    %c0_i32_2 = arith.constant 0 : i32
    return %arg0, %3, %c0_i32_0, %c0_i32_1 : i32, i32, i32, i32
  }
  func.func @transform_1(%arg0: i32, %arg1: i32) -> (i32, i32, i32) {
    %c0_i32 = arith.constant 0 : i32
    %c0_i32_0 = arith.constant 0 : i32
    %c0_i32_1 = arith.constant 0 : i32
    return %arg0, %c0_i32, %c0_i32_0 : i32, i32, i32
  }
  func.func @transform_2(%arg0: i32, %arg1: i32) -> (i32, i32, i32) {
    %c0_i32 = arith.constant 0 : i32
    %c0_i32_0 = arith.constant 0 : i32
    %c0_i32_1 = arith.constant 0 : i32
    return %arg0, %c0_i32, %c0_i32_0 : i32, i32, i32
  }
  func.func @transform_3(%arg0: i32, %arg1: i32) -> (i32, i32, i32, i32) {
    %c2_i32 = arith.constant 2 : i32
    %0 = arith.muli %c2_i32, %arg1 : i32
    %c0_i32 = arith.constant 0 : i32
    %1 = arith.subi %c0_i32, %0 : i32
    %2 = arith.muli %arg0, %1 : i32
    %3 = arith.addi %arg1, %2 : i32
    %c0_i32_0 = arith.constant 0 : i32
    %c0_i32_1 = arith.constant 0 : i32
    %c0_i32_2 = arith.constant 0 : i32
    return %arg0, %3, %c0_i32_0, %c0_i32_1 : i32, i32, i32, i32
  }
}

</mosaic_0001>

<llo_original>
// kernel: gru_encoder_forward.4
$region0: #{gru_encoder_forward.4}
  #allocation0 [shape = 'u32[]', space=smem, size = 0x4, offset = 0x4, fixed_abs, tag = 'smem constant byte address 0x4 - core index']
  #allocation1 [shape = 'u32[144,128]{1,0:T(1,128)}', space=vmem, size = 0x12000, scoped, tag = 'internal scratch']
  %s0 = inlined_call_operand.hbm [shape: f32[1,64,16], index: 0, kind: input, shape index: {}]
  %s1 = inlined_call_operand.hbm [shape: f32[1,16,96], index: 1, kind: input, shape index: {}]
  %s2 = inlined_call_operand.hbm [shape: f32[1,96], index: 2, kind: input, shape index: {}]
  %s3 = inlined_call_operand.hbm [shape: f32[2,64,48], index: 3, kind: output, shape index: {}]
  %s4 = sld [smem:[#allocation0]]
  $region34: #{gru_encoder_forward.4} parent=0
    _
  %s6 = ssub.s32 1, %s4
  %s7 = scalar_select 0, %s6, %s4
  $region1: #{gru_encoder_forward.4} parent=0
    #allocation2 [shape = 'u8[32768]{0}', space=vmem, size = 0x8000, scoped, tag = 'input window, operand 0, single buffered']
    #allocation3 [shape = 's32[1]{0}', space=sflag, size = 0x4, scoped, tag = 'scoped memory for gru_encoder_forward.4']
    #allocation4 [shape = 's32[1]{0}', space=sflag, size = 0x4, scoped, tag = 'scoped memory for gru_encoder_forward.4']
    #allocation5 [shape = 'u8[8192]{0}', space=vmem, size = 0x2000, scoped, tag = 'input window, operand 1, single buffered']
    #allocation6 [shape = 's32[1]{0}', space=sflag, size = 0x4, scoped, tag = 'scoped memory for gru_encoder_forward.4']
    #allocation7 [shape = 'u8[512]{0}', space=vmem, size = 0x400, scoped, tag = 'input window, operand 2, single buffered']
    #allocation8 [shape = 'u8[65536]{0}', space=vmem, size = 0x10000, scoped, tag = 'output window, operand 0, single buffered']
    %8 = vsyncpa [#allocation3], 0
    %9 = vsyncpa [#allocation6], 0
    %10 = vsyncpa [#allocation4], 0
    // Predicated region
    $region2: #{gru_encoder_forward.4} parent=1 // pred_check
      _
    $region3: #{gru_encoder_forward.4} parent=1 // pred_check_branch
      %12 = sbr.rel (0) target = $region5
    $region4: #{gru_encoder_forward.4} parent=1 // pred_region
      %s14 = ssub.s32 1024, 1024
      %15 = vsyncadd [#allocation3], %s14
      %s16 = sshll.u32 [#allocation2], 4
      %s17 = int_to_ptr.vmem [resolvable:$true] %s16
      %22 = dma.hbm_to_vmem [thread:$0]  %s0, 1024, %s17, [#allocation3], 128, 128, 8
    $region5: #{gru_encoder_forward.4} parent=1 // pred_fallthru
      _
    // Predicated region
    $region6: #{gru_encoder_forward.4} parent=1 // pred_check
      _
    $region7: #{gru_encoder_forward.4} parent=1 // pred_check_branch
      %24 = sbr.rel (0) target = $region9
    $region8: #{gru_encoder_forward.4} parent=1 // pred_region
      %s26 = ssub.s32 256, 256
      %27 = vsyncadd [#allocation6], %s26
      %s28 = sshll.u32 [#allocation5], 4
      %s29 = int_to_ptr.vmem [resolvable:$true] %s28
      %34 = dma.hbm_to_vmem [thread:$0]  %s1, 256, %s29, [#allocation6], 128, 128, 8
    $region9: #{gru_encoder_forward.4} parent=1 // pred_fallthru
      _
    // Predicated region
    $region10: #{gru_encoder_forward.4} parent=1 // pred_check
      _
    $region11: #{gru_encoder_forward.4} parent=1 // pred_check_branch
      %36 = sbr.rel (0) target = $region13
    $region12: #{gru_encoder_forward.4} parent=1 // pred_region
      %s38 = ssub.s32 16, 16
      %39 = vsyncadd [#allocation6], %s38
      %s41 = sshll.u32 [#allocation7], 4
      %s42 = int_to_ptr.vmem [resolvable:$true] %s41
      %44 = dma.hbm_to_vmem [thread:$0]  %s2, 16, %s42, [#allocation6]
    $region13: #{gru_encoder_forward.4} parent=1 // pred_fallthru
      _
    // Predicated region
    $region14: #{gru_encoder_forward.4} parent=1 // pred_check
      _
    $region15: #{gru_encoder_forward.4} parent=1 // pred_check_branch
      %46 = sbr.rel (0) target = $region17
    $region16: #{gru_encoder_forward.4} parent=1 // pred_region
      %47 = dma.done [#allocation3], 1024
    $region17: #{gru_encoder_forward.4} parent=1 // pred_fallthru
      _
    // Predicated region
    $region18: #{gru_encoder_forward.4} parent=1 // pred_check
      _
    $region19: #{gru_encoder_forward.4} parent=1 // pred_check_branch
      %49 = sbr.rel (0) target = $region21
    $region20: #{gru_encoder_forward.4} parent=1 // pred_region
      %50 = dma.done [#allocation6], 256
    $region21: #{gru_encoder_forward.4} parent=1 // pred_fallthru
      _
    // Predicated region
    $region22: #{gru_encoder_forward.4} parent=1 // pred_check
      _
    $region23: #{gru_encoder_forward.4} parent=1 // pred_check_branch
      %52 = sbr.rel (0) target = $region25
    $region24: #{gru_encoder_forward.4} parent=1 // pred_region
      %53 = dma.done [#allocation6], 16
    $region25: #{gru_encoder_forward.4} parent=1 // pred_fallthru
      _
    %v54 = vld [vmem:[#allocation2] sm:$0xff]
    %v55 = vld [vmem:[#allocation2 + $0x8] sm:$0xff]
    %v56 = vld [vmem:[#allocation2 + $0x10] sm:$0xff]
    %v57 = vld [vmem:[#allocation2 + $0x18] sm:$0xff]
    %v58 = vld [vmem:[#allocation2 + $0x20] sm:$0xff]
    %v59 = vld [vmem:[#allocation2 + $0x28] sm:$0xff]
    %v60 = vld [vmem:[#allocation2 + $0x30] sm:$0xff]
    %v61 = vld [vmem:[#allocation2 + $0x38] sm:$0xff]
    %v62 = vld [vmem:[#allocation5] sm:$0xff]
    %v63 = vld [vmem:[#allocation5 + $0x8] sm:$0xff]
    %v64 = vld [vmem:[#allocation7] sm:$0x1]
    %v66 = vlaneseq
    %v67 = vshrl.u32 %v66, 7
    %v68 = vsub.s32 0, %v67
    %v69 = vrot.slane %v64, %v68
    %vm71 = vcmask 130048
    %v73 = vsel %vm71, %v54, 0
    %v76 = vsel %vm71, %v55, 0
    %v79 = vsel %vm71, %v56, 0
    %v82 = vsel %vm71, %v57, 0
    %v85 = vsel %vm71, %v58, 0
    %v88 = vsel %vm71, %v59, 0
    %v91 = vsel %vm71, %v60, 0
    %v94 = vsel %vm71, %v61, 0
    %96 = vmatprep.subr.mxu0 0.0
    %97 = vmatpush1.msra.mxu0 %v62
    %98 = vmatprep.subr.mxu0 0.0
    %99 = vmatpush1.msra.mxu0 %v63
    %100 = vmatprep.subr.mxu0 0.0
    %101 = vmatpush1.msra.mxu0 0.0
    %102 = vmatprep.subr.mxu0 0.0
    %103 = vmatpush1.msra.mxu0 0.0
    %104 = vmatprep.subr.mxu0 0.0
    %105 = vmatpush1.msra.mxu0 0.0
    %106 = vmatprep.subr.mxu0 0.0
    %107 = vmatpush1.msra.mxu0 0.0
    %108 = vmatprep.subr.mxu0 0.0
    %109 = vmatpush1.msra.mxu0 0.0
    %110 = vmatprep.subr.mxu0 0.0
    %111 = vmatpush1.msra.mxu0 0.0
    %112 = vmatprep.subr.mxu0 0.0
    %113 = vmatpush1.msra.mxu0 0.0
    %114 = vmatprep.subr.mxu0 0.0
    %115 = vmatpush1.msra.mxu0 0.0
    %116 = vmatprep.subr.mxu0 0.0
    %117 = vmatpush1.msra.mxu0 0.0
    %118 = vmatprep.subr.mxu0 0.0
    %119 = vmatpush1.msra.mxu0 0.0
    %120 = vmatprep.subr.mxu0 0.0
    %121 = vmatpush1.msra.mxu0 0.0
    %122 = vmatprep.subr.mxu0 0.0
    %123 = vmatpush1.msra.mxu0 0.0
    %124 = vmatprep.subr.mxu0 0.0
    %125 = vmatpush1.msra.mxu0 0.0
    %126 = vmatprep.subr.mxu0 0.0
    %127 = vmatpush1.msra.mxu0 0.0
    %128 = vmatprep.subr.mxu0 0.0
    %129 = vmatpush1.msra.mxu0 0.0
    %130 = vmatprep.subr.mxu0 0.0
    %131 = vmatpush1.msra.mxu0 0.0
    %132 = vmatprep.subr.mxu0 0.0
    %133 = vmatpush1.msra.mxu0 0.0
    %134 = vmatprep.subr.mxu0 0.0
    %135 = vmatpush1.msra.mxu0 0.0
    %136 = vmatprep.subr.mxu0 0.0
    %137 = vmatpush1.msra.mxu0 0.0
    %138 = vmatprep.subr.mxu0 0.0
    %139 = vmatpush1.msra.mxu0 0.0
    %140 = vmatprep.subr.mxu0 0.0
    %141 = vmatpush1.msra.mxu0 0.0
    %142 = vmatprep.subr.mxu0 0.0
    %143 = vmatpush1.msra.mxu0 0.0
    %144 = vmatprep.subr.mxu0 0.0
    %145 = vmatpush1.msra.mxu0 0.0
    %146 = vmatprep.subr.mxu0 0.0
    %147 = vmatpush1.msra.mxu0 0.0
    %148 = vmatprep.subr.mxu0 0.0
    %149 = vmatpush1.msra.mxu0 0.0
    %150 = vmatprep.subr.mxu0 0.0
    %151 = vmatpush1.msra.mxu0 0.0
    %152 = vmatprep.subr.mxu0 0.0
    %153 = vmatpush1.msra.mxu0 0.0
    %154 = vmatprep.subr.mxu0 0.0
    %155 = vmatpush1.msra.mxu0 0.0
    %156 = vmatprep.subr.mxu0 0.0
    %157 = vmatpush1.msra.mxu0 0.0
    %158 = vmatprep.subr.mxu0 0.0
    %159 = vmatpush1.msra.mxu0 0.0
    %160 = vmatprep.mubr.f32.mxu0 0.0
    %161 = vmatmul.mubr.f32.gmra.mrb[0].mxu0 %v73
    %v162 = vpop.f32.mrb[0].mxu0
    %v163 = vadd.f32 %v69, %v162
    %v164 = vpop.f32.mrb[0].mxu0
    %165 = vmatprep.mubr.f32.mxu0 0.0
    %166 = vmatmul.mubr.f32.gmra.mrb[0].mxu0 %v76
    %v167 = vpop.f32.mrb[0].mxu0
    %v168 = vadd.f32 %v69, %v167
    %v169 = vpop.f32.mrb[0].mxu0
    %170 = vmatprep.mubr.f32.mxu0 0.0
    %171 = vmatmul.mubr.f32.gmra.mrb[0].mxu0 %v79
    %v172 = vpop.f32.mrb[0].mxu0
    %v173 = vadd.f32 %v69, %v172
    %v174 = vpop.f32.mrb[0].mxu0
    %175 = vmatprep.mubr.f32.mxu0 0.0
    %176 = vmatmul.mubr.f32.gmra.mrb[0].mxu0 %v82
    %v177 = vpop.f32.mrb[0].mxu0
    %v178 = vadd.f32 %v69, %v177
    %v179 = vpop.f32.mrb[0].mxu0
    %180 = vmatprep.mubr.f32.mxu0 0.0
    %181 = vmatmul.mubr.f32.gmra.mrb[0].mxu0 %v85
    %v182 = vpop.f32.mrb[0].mxu0
    %v183 = vadd.f32 %v69, %v182
    %v184 = vpop.f32.mrb[0].mxu0
    %185 = vmatprep.mubr.f32.mxu0 0.0
    %186 = vmatmul.mubr.f32.gmra.mrb[0].mxu0 %v88
    %v187 = vpop.f32.mrb[0].mxu0
    %v188 = vadd.f32 %v69, %v187
    %v189 = vpop.f32.mrb[0].mxu0
    %190 = vmatprep.mubr.f32.mxu0 0.0
    %191 = vmatmul.mubr.f32.gmra.mrb[0].mxu0 %v91
    %v192 = vpop.f32.mrb[0].mxu0
    %v193 = vadd.f32 %v69, %v192
    %v194 = vpop.f32.mrb[0].mxu0
    %195 = vmatprep.mubr.f32.mxu0 0.0
    %196 = vmatmul.mubr.f32.gmra.mrb[0].mxu0 %v94
    %v197 = vpop.f32.mrb[0].mxu0
    %v198 = vadd.f32 %v69, %v197
    %v199 = vpop.f32.mrb[0].mxu0
    %200 = vdwg.mxu0
    %vm201 = vcmask 392192
    %202 = vst.msk [vmem:[#allocation8] sm:$0xff] %vm201, %v163
    %203 = vst.msk [vmem:[#allocation8 + $0x8] sm:$0xff] %vm201, %v168
    %204 = vst.msk [vmem:[#allocation8 + $0x10] sm:$0xff] %vm201, %v173
    %205 = vst.msk [vmem:[#allocation8 + $0x18] sm:$0xff] %vm201, %v178
    %206 = vst.msk [vmem:[#allocation8 + $0x20] sm:$0xff] %vm201, %v183
    %207 = vst.msk [vmem:[#allocation8 + $0x28] sm:$0xff] %vm201, %v188
    %208 = vst.msk [vmem:[#allocation8 + $0x30] sm:$0xff] %vm201, %v193
    %209 = vst.msk [vmem:[#allocation8 + $0x38] sm:$0xff] %vm201, %v198
    %218 = vrot.lane.b32.xlu0 %v163, 80
    %v219 = vpop.permute.xlu0 %218
    %220 = vrot.lane.b32.xlu0 %v168, 80
    %v221 = vpop.permute.xlu0 %220
    %222 = vrot.lane.b32.xlu0 %v173, 80
    %v223 = vpop.permute.xlu0 %222
    %224 = vrot.lane.b32.xlu0 %v178, 80
    %v225 = vpop.permute.xlu0 %224
    %226 = vrot.lane.b32.xlu0 %v183, 80
    %v227 = vpop.permute.xlu0 %226
    %228 = vrot.lane.b32.xlu0 %v188, 80
    %v229 = vpop.permute.xlu0 %228
    %230 = vrot.lane.b32.xlu0 %v193, 80
    %v231 = vpop.permute.xlu0 %230
    %232 = vrot.lane.b32.xlu0 %v198, 80
    %v233 = vpop.permute.xlu0 %232
    %s242 = scalar_lea.vmem [#allocation8], 64
    %243 = vst.msk [vmem:[%s242] sm:$0xff] %vm201, %v219
    %244 = vst.msk [vmem:[%s242 + $0x8] sm:$0xff] %vm201, %v221
    %245 = vst.msk [vmem:[%s242 + $0x10] sm:$0xff] %vm201, %v223
    %246 = vst.msk [vmem:[%s242 + $0x18] sm:$0xff] %vm201, %v225
    %247 = vst.msk [vmem:[%s242 + $0x20] sm:$0xff] %vm201, %v227
    %248 = vst.msk [vmem:[%s242 + $0x28] sm:$0xff] %vm201, %v229
    %249 = vst.msk [vmem:[%s242 + $0x30] sm:$0xff] %vm201, %v231
    %250 = vst.msk [vmem:[%s242 + $0x38] sm:$0xff] %vm201, %v233
    // Predicated region
    $region26: #{gru_encoder_forward.4} parent=1 // pred_check
      _
    $region27: #{gru_encoder_forward.4} parent=1 // pred_check_branch
      %252 = sbr.rel (0) target = $region29
    $region28: #{gru_encoder_forward.4} parent=1 // pred_region
      %s254 = ssub.s32 2048, 2048
      %255 = vsyncadd [#allocation4], %s254
      %s256 = sshll.u32 [#allocation8], 4
      %s257 = int_to_ptr.vmem [resolvable:$true] %s256
      %262 = dma.vmem_to_hbm [thread:$0]  %s257, 2048, %s3, [#allocation4], 128, 128, 8
    $region29: #{gru_encoder_forward.4} parent=1 // pred_fallthru
      _
    // Predicated region
    $region30: #{gru_encoder_forward.4} parent=1 // pred_check
      _
    $region31: #{gru_encoder_forward.4} parent=1 // pred_check_branch
      %264 = sbr.rel (0) target = $region33
    $region32: #{gru_encoder_forward.4} parent=1 // pred_region
      %265 = dma.done [#allocation4], 2048
    $region33: #{gru_encoder_forward.4} parent=1 // pred_fallthru
      _
    %266 = vsyncpa [#allocation3], 1
    %267 = vsyncpa [#allocation6], 1
    %268 = vsyncpa [#allocation4], 1

// kernel: gru_encoder_forward.6
$region0: #{gru_encoder_forward.6}
  #allocation0 [shape = 'u32[]', space=smem, size = 0x4, offset = 0x4, fixed_abs, tag = 'smem constant byte address 0x4 - core index']
  #allocation1 [shape = 'u32[144,128]{1,0:T(1,128)}', space=vmem, size = 0x12000, scoped, tag = 'internal scratch']
  %s0 = inlined_call_operand.hbm [shape: f32[2,64,16], index: 0, kind: input, shape index: {}]
  %s1 = inlined_call_operand.hbm [shape: f32[2,16,96], index: 1, kind: input, shape index: {}]
  %s2 = inlined_call_operand.hbm [shape: f32[1,96], index: 2, kind: input, shape index: {}]
  %s3 = inlined_call_operand.hbm [shape: f32[2,64,48], index: 3, kind: output, shape index: {}]
  %s4 = sld [smem:[#allocation0]]
  $region34: #{gru_encoder_forward.6} parent=0
    _
  %s6 = ssub.s32 1, %s4
  %s7 = scalar_select 0, %s6, %s4
  $region1: #{gru_encoder_forward.6} parent=0
    #allocation2 [shape = 'u8[65536]{0}', space=vmem, size = 0x10000, scoped, tag = 'input window, operand 0, single buffered']
    #allocation3 [shape = 's32[1]{0}', space=sflag, size = 0x4, scoped, tag = 'scoped memory for gru_encoder_forward.6']
    #allocation4 [shape = 's32[1]{0}', space=sflag, size = 0x4, scoped, tag = 'scoped memory for gru_encoder_forward.6']
    #allocation5 [shape = 'u8[16384]{0}', space=vmem, size = 0x4000, scoped, tag = 'input window, operand 1, single buffered']
    #allocation6 [shape = 's32[1]{0}', space=sflag, size = 0x4, scoped, tag = 'scoped memory for gru_encoder_forward.6']
    #allocation7 [shape = 'u8[512]{0}', space=vmem, size = 0x400, scoped, tag = 'input window, operand 2, single buffered']
    #allocation8 [shape = 'u8[65536]{0}', space=vmem, size = 0x10000, scoped, tag = 'output window, operand 0, single buffered']
    %8 = vsyncpa [#allocation3], 0
    %9 = vsyncpa [#allocation6], 0
    %10 = vsyncpa [#allocation4], 0
    // Predicated region
    $region2: #{gru_encoder_forward.6} parent=1 // pred_check
      _
    $region3: #{gru_encoder_forward.6} parent=1 // pred_check_branch
      %12 = sbr.rel (0) target = $region5
    $region4: #{gru_encoder_forward.6} parent=1 // pred_region
      %s14 = ssub.s32 2048, 2048
      %15 = vsyncadd [#allocation3], %s14
      %s16 = sshll.u32 [#allocation2], 4
      %s17 = int_to_ptr.vmem [resolvable:$true] %s16
      %22 = dma.hbm_to_vmem [thread:$0]  %s0, 2048, %s17, [#allocation3], 128, 128, 8
    $region5: #{gru_encoder_forward.6} parent=1 // pred_fallthru
      _
    // Predicated region
    $region6: #{gru_encoder_forward.6} parent=1 // pred_check
      _
    $region7: #{gru_encoder_forward.6} parent=1 // pred_check_branch
      %24 = sbr.rel (0) target = $region9
    $region8: #{gru_encoder_forward.6} parent=1 // pred_region
      %s26 = ssub.s32 512, 512
      %27 = vsyncadd [#allocation6], %s26
      %s28 = sshll.u32 [#allocation5], 4
      %s29 = int_to_ptr.vmem [resolvable:$true] %s28
      %34 = dma.hbm_to_vmem [thread:$0]  %s1, 512, %s29, [#allocation6], 128, 128, 8
    $region9: #{gru_encoder_forward.6} parent=1 // pred_fallthru
      _
    // Predicated region
    $region10: #{gru_encoder_forward.6} parent=1 // pred_check
      _
    $region11: #{gru_encoder_forward.6} parent=1 // pred_check_branch
      %36 = sbr.rel (0) target = $region13
    $region12: #{gru_encoder_forward.6} parent=1 // pred_region
      %s38 = ssub.s32 16, 16
      %39 = vsyncadd [#allocation6], %s38
      %s41 = sshll.u32 [#allocation7], 4
      %s42 = int_to_ptr.vmem [resolvable:$true] %s41
      %44 = dma.hbm_to_vmem [thread:$0]  %s2, 16, %s42, [#allocation6]
    $region13: #{gru_encoder_forward.6} parent=1 // pred_fallthru
      _
    // Predicated region
    $region14: #{gru_encoder_forward.6} parent=1 // pred_check
      _
    $region15: #{gru_encoder_forward.6} parent=1 // pred_check_branch
      %46 = sbr.rel (0) target = $region17
    $region16: #{gru_encoder_forward.6} parent=1 // pred_region
      %47 = dma.done [#allocation3], 2048
    $region17: #{gru_encoder_forward.6} parent=1 // pred_fallthru
      _
    // Predicated region
    $region18: #{gru_encoder_forward.6} parent=1 // pred_check
      _
    $region19: #{gru_encoder_forward.6} parent=1 // pred_check_branch
      %49 = sbr.rel (0) target = $region21
    $region20: #{gru_encoder_forward.6} parent=1 // pred_region
      %50 = dma.done [#allocation6], 512
    $region21: #{gru_encoder_forward.6} parent=1 // pred_fallthru
      _
    // Predicated region
    $region22: #{gru_encoder_forward.6} parent=1 // pred_check
      _
    $region23: #{gru_encoder_forward.6} parent=1 // pred_check_branch
      %52 = sbr.rel (0) target = $region25
    $region24: #{gru_encoder_forward.6} parent=1 // pred_region
      %53 = dma.done [#allocation6], 16
    $region25: #{gru_encoder_forward.6} parent=1 // pred_fallthru
      _
    %v54 = vld [vmem:[#allocation2] sm:$0xff]
    %v55 = vld [vmem:[#allocation2 + $0x8] sm:$0xff]
    %v56 = vld [vmem:[#allocation2 + $0x10] sm:$0xff]
    %v57 = vld [vmem:[#allocation2 + $0x18] sm:$0xff]
    %v58 = vld [vmem:[#allocation2 + $0x20] sm:$0xff]
    %v59 = vld [vmem:[#allocation2 + $0x28] sm:$0xff]
    %v60 = vld [vmem:[#allocation2 + $0x30] sm:$0xff]
    %v61 = vld [vmem:[#allocation2 + $0x38] sm:$0xff]
    %v62 = vld [vmem:[#allocation5] sm:$0xff]
    %v63 = vld [vmem:[#allocation5 + $0x8] sm:$0xff]
    %s64 = scalar_lea.vmem [#allocation2], 64
    %v65 = vld [vmem:[%s64] sm:$0xff]
    %v66 = vld [vmem:[%s64 + $0x8] sm:$0xff]
    %v67 = vld [vmem:[%s64 + $0x10] sm:$0xff]
    %v68 = vld [vmem:[%s64 + $0x18] sm:$0xff]
    %v69 = vld [vmem:[%s64 + $0x20] sm:$0xff]
    %v70 = vld [vmem:[%s64 + $0x28] sm:$0xff]
    %v71 = vld [vmem:[%s64 + $0x30] sm:$0xff]
    %v72 = vld [vmem:[%s64 + $0x38] sm:$0xff]
    %s73 = scalar_lea.vmem [#allocation5], 16
    %v74 = vld [vmem:[%s73] sm:$0xff]
    %v75 = vld [vmem:[%s73 + $0x8] sm:$0xff]
    %vm76 = vcmask 130048
    %v78 = vsel %vm76, %v65, 0
    %v81 = vsel %vm76, %v66, 0
    %v84 = vsel %vm76, %v67, 0
    %v87 = vsel %vm76, %v68, 0
    %v90 = vsel %vm76, %v69, 0
    %v93 = vsel %vm76, %v70, 0
    %v96 = vsel %vm76, %v71, 0
    %v99 = vsel %vm76, %v72, 0
    %101 = vmatprep.subr.mxu0 0.0
    %102 = vmatpush1.msra.mxu0 %v74
    %103 = vmatprep.subr.mxu0 0.0
    %104 = vmatpush1.msra.mxu0 %v75
    %105 = vmatprep.subr.mxu0 0.0
    %106 = vmatpush1.msra.mxu0 0.0
    %107 = vmatprep.subr.mxu0 0.0
    %108 = vmatpush1.msra.mxu0 0.0
    %109 = vmatprep.subr.mxu0 0.0
    %110 = vmatpush1.msra.mxu0 0.0
    %111 = vmatprep.subr.mxu0 0.0
    %112 = vmatpush1.msra.mxu0 0.0
    %113 = vmatprep.subr.mxu0 0.0
    %114 = vmatpush1.msra.mxu0 0.0
    %115 = vmatprep.subr.mxu0 0.0
    %116 = vmatpush1.msra.mxu0 0.0
    %117 = vmatprep.subr.mxu0 0.0
    %118 = vmatpush1.msra.mxu0 0.0
    %119 = vmatprep.subr.mxu0 0.0
    %120 = vmatpush1.msra.mxu0 0.0
    %121 = vmatprep.subr.mxu0 0.0
    %122 = vmatpush1.msra.mxu0 0.0
    %123 = vmatprep.subr.mxu0 0.0
    %124 = vmatpush1.msra.mxu0 0.0
    %125 = vmatprep.subr.mxu0 0.0
    %126 = vmatpush1.msra.mxu0 0.0
    %127 = vmatprep.subr.mxu0 0.0
    %128 = vmatpush1.msra.mxu0 0.0
    %129 = vmatprep.subr.mxu0 0.0
    %130 = vmatpush1.msra.mxu0 0.0
    %131 = vmatprep.subr.mxu0 0.0
    %132 = vmatpush1.msra.mxu0 0.0
    %133 = vmatprep.subr.mxu0 0.0
    %134 = vmatpush1.msra.mxu0 0.0
    %135 = vmatprep.subr.mxu0 0.0
    %136 = vmatpush1.msra.mxu0 0.0
    %137 = vmatprep.subr.mxu0 0.0
    %138 = vmatpush1.msra.mxu0 0.0
    %139 = vmatprep.subr.mxu0 0.0
    %140 = vmatpush1.msra.mxu0 0.0
    %141 = vmatprep.subr.mxu0 0.0
    %142 = vmatpush1.msra.mxu0 0.0
    %143 = vmatprep.subr.mxu0 0.0
    %144 = vmatpush1.msra.mxu0 0.0
    %145 = vmatprep.subr.mxu0 0.0
    %146 = vmatpush1.msra.mxu0 0.0
    %147 = vmatprep.subr.mxu0 0.0
    %148 = vmatpush1.msra.mxu0 0.0
    %149 = vmatprep.subr.mxu0 0.0
    %150 = vmatpush1.msra.mxu0 0.0
    %151 = vmatprep.subr.mxu0 0.0
    %152 = vmatpush1.msra.mxu0 0.0
    %153 = vmatprep.subr.mxu0 0.0
    %154 = vmatpush1.msra.mxu0 0.0
    %155 = vmatprep.subr.mxu0 0.0
    %156 = vmatpush1.msra.mxu0 0.0
    %157 = vmatprep.subr.mxu0 0.0
    %158 = vmatpush1.msra.mxu0 0.0
    %159 = vmatprep.subr.mxu0 0.0
    %160 = vmatpush1.msra.mxu0 0.0
    %161 = vmatprep.subr.mxu0 0.0
    %162 = vmatpush1.msra.mxu0 0.0
    %163 = vmatprep.subr.mxu0 0.0
    %164 = vmatpush1.msra.mxu0 0.0
    %165 = vmatprep.mubr.f32.mxu0 0.0
    %166 = vmatmul.mubr.f32.gmra.mrb[0].mxu0 %v78
    %v167 = vpop.f32.mrb[0].mxu0
    %v168 = vadd.f32 0.0, %v167
    %v169 = vpop.f32.mrb[0].mxu0
    %170 = vmatprep.mubr.f32.mxu0 0.0
    %171 = vmatmul.mubr.f32.gmra.mrb[0].mxu0 %v81
    %v172 = vpop.f32.mrb[0].mxu0
    %v173 = vadd.f32 0.0, %v172
    %v174 = vpop.f32.mrb[0].mxu0
    %175 = vmatprep.mubr.f32.mxu0 0.0
    %176 = vmatmul.mubr.f32.gmra.mrb[0].mxu0 %v84
    %v177 = vpop.f32.mrb[0].mxu0
    %v178 = vadd.f32 0.0, %v177
    %v179 = vpop.f32.mrb[0].mxu0
    %180 = vmatprep.mubr.f32.mxu0 0.0
    %181 = vmatmul.mubr.f32.gmra.mrb[0].mxu0 %v87
    %v182 = vpop.f32.mrb[0].mxu0
    %v183 = vadd.f32 0.0, %v182
    %v184 = vpop.f32.mrb[0].mxu0
    %185 = vmatprep.mubr.f32.mxu0 0.0
    %186 = vmatmul.mubr.f32.gmra.mrb[0].mxu0 %v90
    %v187 = vpop.f32.mrb[0].mxu0
    %v188 = vadd.f32 0.0, %v187
    %v189 = vpop.f32.mrb[0].mxu0
    %190 = vmatprep.mubr.f32.mxu0 0.0
    %191 = vmatmul.mubr.f32.gmra.mrb[0].mxu0 %v93
    %v192 = vpop.f32.mrb[0].mxu0
    %v193 = vadd.f32 0.0, %v192
    %v194 = vpop.f32.mrb[0].mxu0
    %195 = vmatprep.mubr.f32.mxu0 0.0
    %196 = vmatmul.mubr.f32.gmra.mrb[0].mxu0 %v96
    %v197 = vpop.f32.mrb[0].mxu0
    %v198 = vadd.f32 0.0, %v197
    %v199 = vpop.f32.mrb[0].mxu0
    %200 = vmatprep.mubr.f32.mxu0 0.0
    %201 = vmatmul.mubr.f32.gmra.mrb[0].mxu0 %v99
    %v202 = vpop.f32.mrb[0].mxu0
    %v203 = vadd.f32 0.0, %v202
    %v204 = vpop.f32.mrb[0].mxu0
    %205 = vdwg.mxu0
    %v207 = vsel %vm76, %v54, 0
    %v210 = vsel %vm76, %v55, 0
    %v213 = vsel %vm76, %v56, 0
    %v216 = vsel %vm76, %v57, 0
    %v219 = vsel %vm76, %v58, 0
    %v222 = vsel %vm76, %v59, 0
    %v225 = vsel %vm76, %v60, 0
    %v228 = vsel %vm76, %v61, 0
    %230 = vmatprep.subr.mxu0 0.0
    %231 = vmatpush1.msra.mxu0 %v62
    %232 = vmatprep.subr.mxu0 0.0
    %233 = vmatpush1.msra.mxu0 %v63
    %234 = vmatprep.subr.mxu0 0.0
    %235 = vmatpush1.msra.mxu0 0.0
    %236 = vmatprep.subr.mxu0 0.0
    %237 = vmatpush1.msra.mxu0 0.0
    %238 = vmatprep.subr.mxu0 0.0
    %239 = vmatpush1.msra.mxu0 0.0
    %240 = vmatprep.subr.mxu0 0.0
    %241 = vmatpush1.msra.mxu0 0.0
    %242 = vmatprep.subr.mxu0 0.0
    %243 = vmatpush1.msra.mxu0 0.0
    %244 = vmatprep.subr.mxu0 0.0
    %245 = vmatpush1.msra.mxu0 0.0
    %246 = vmatprep.subr.mxu0 0.0
    %247 = vmatpush1.msra.mxu0 0.0
    %248 = vmatprep.subr.mxu0 0.0
    %249 = vmatpush1.msra.mxu0 0.0
    %250 = vmatprep.subr.mxu0 0.0
    %251 = vmatpush1.msra.mxu0 0.0
    %252 = vmatprep.subr.mxu0 0.0
    %253 = vmatpush1.msra.mxu0 0.0
    %254 = vmatprep.subr.mxu0 0.0
    %255 = vmatpush1.msra.mxu0 0.0
    %256 = vmatprep.subr.mxu0 0.0
    %257 = vmatpush1.msra.mxu0 0.0
    %258 = vmatprep.subr.mxu0 0.0
    %259 = vmatpush1.msra.mxu0 0.0
    %260 = vmatprep.subr.mxu0 0.0
    %261 = vmatpush1.msra.mxu0 0.0
    %262 = vmatprep.subr.mxu0 0.0
    %263 = vmatpush1.msra.mxu0 0.0
    %264 = vmatprep.subr.mxu0 0.0
    %265 = vmatpush1.msra.mxu0 0.0
    %266 = vmatprep.subr.mxu0 0.0
    %267 = vmatpush1.msra.mxu0 0.0
    %268 = vmatprep.subr.mxu0 0.0
    %269 = vmatpush1.msra.mxu0 0.0
    %270 = vmatprep.subr.mxu0 0.0
    %271 = vmatpush1.msra.mxu0 0.0
    %272 = vmatprep.subr.mxu0 0.0
    %273 = vmatpush1.msra.mxu0 0.0
    %274 = vmatprep.subr.mxu0 0.0
    %275 = vmatpush1.msra.mxu0 0.0
    %276 = vmatprep.subr.mxu0 0.0
    %277 = vmatpush1.msra.mxu0 0.0
    %278 = vmatprep.subr.mxu0 0.0
    %279 = vmatpush1.msra.mxu0 0.0
    %280 = vmatprep.subr.mxu0 0.0
    %281 = vmatpush1.msra.mxu0 0.0
    %282 = vmatprep.subr.mxu0 0.0
    %283 = vmatpush1.msra.mxu0 0.0
    %284 = vmatprep.subr.mxu0 0.0
    %285 = vmatpush1.msra.mxu0 0.0
    %286 = vmatprep.subr.mxu0 0.0
    %287 = vmatpush1.msra.mxu0 0.0
    %288 = vmatprep.subr.mxu0 0.0
    %289 = vmatpush1.msra.mxu0 0.0
    %290 = vmatprep.subr.mxu0 0.0
    %291 = vmatpush1.msra.mxu0 0.0
    %292 = vmatprep.subr.mxu0 0.0
    %293 = vmatpush1.msra.mxu0 0.0
    %294 = vmatprep.mubr.f32.mxu0 0.0
    %295 = vmatmul.mubr.f32.gmra.mrb[0].mxu0 %v207
    %v296 = vpop.f32.mrb[0].mxu0
    %v297 = vadd.f32 %v168, %v296
    %v298 = vpop.f32.mrb[0].mxu0
    %299 = vmatprep.mubr.f32.mxu0 0.0
    %300 = vmatmul.mubr.f32.gmra.mrb[0].mxu0 %v210
    %v301 = vpop.f32.mrb[0].mxu0
    %v302 = vadd.f32 %v173, %v301
    %v303 = vpop.f32.mrb[0].mxu0
    %304 = vmatprep.mubr.f32.mxu0 0.0
    %305 = vmatmul.mubr.f32.gmra.mrb[0].mxu0 %v213
    %v306 = vpop.f32.mrb[0].mxu0
    %v307 = vadd.f32 %v178, %v306
    %v308 = vpop.f32.mrb[0].mxu0
    %309 = vmatprep.mubr.f32.mxu0 0.0
    %310 = vmatmul.mubr.f32.gmra.mrb[0].mxu0 %v216
    %v311 = vpop.f32.mrb[0].mxu0
    %v312 = vadd.f32 %v183, %v311
    %v313 = vpop.f32.mrb[0].mxu0
    %314 = vmatprep.mubr.f32.mxu0 0.0
    %315 = vmatmul.mubr.f32.gmra.mrb[0].mxu0 %v219
    %v316 = vpop.f32.mrb[0].mxu0
    %v317 = vadd.f32 %v188, %v316
    %v318 = vpop.f32.mrb[0].mxu0
    %319 = vmatprep.mubr.f32.mxu0 0.0
    %320 = vmatmul.mubr.f32.gmra.mrb[0].mxu0 %v222
    %v321 = vpop.f32.mrb[0].mxu0
    %v322 = vadd.f32 %v193, %v321
    %v323 = vpop.f32.mrb[0].mxu0
    %324 = vmatprep.mubr.f32.mxu0 0.0
    %325 = vmatmul.mubr.f32.gmra.mrb[0].mxu0 %v225
    %v326 = vpop.f32.mrb[0].mxu0
    %v327 = vadd.f32 %v198, %v326
    %v328 = vpop.f32.mrb[0].mxu0
    %329 = vmatprep.mubr.f32.mxu0 0.0
    %330 = vmatmul.mubr.f32.gmra.mrb[0].mxu0 %v228
    %v331 = vpop.f32.mrb[0].mxu0
    %v332 = vadd.f32 %v203, %v331
    %v333 = vpop.f32.mrb[0].mxu0
    %334 = vdwg.mxu0
    %v335 = vld [vmem:[#allocation7] sm:$0x1]
    %v337 = vlaneseq
    %v338 = vshrl.u32 %v337, 7
    %v339 = vsub.s32 0, %v338
    %v340 = vrot.slane %v335, %v339
    %v342 = vadd.f32 %v297, %v340
    %v343 = vadd.f32 %v302, %v340
    %v344 = vadd.f32 %v307, %v340
    %v345 = vadd.f32 %v312, %v340
    %v346 = vadd.f32 %v317, %v340
    %v347 = vadd.f32 %v322, %v340
    %v348 = vadd.f32 %v327, %v340
    %v349 = vadd.f32 %v332, %v340
    %vm350 = vcmask 392192
    %351 = vst.msk [vmem:[#allocation8] sm:$0xff] %vm350, %v342
    %352 = vst.msk [vmem:[#allocation8 + $0x8] sm:$0xff] %vm350, %v343
    %353 = vst.msk [vmem:[#allocation8 + $0x10] sm:$0xff] %vm350, %v344
    %354 = vst.msk [vmem:[#allocation8 + $0x18] sm:$0xff] %vm350, %v345
    %355 = vst.msk [vmem:[#allocation8 + $0x20] sm:$0xff] %vm350, %v346
    %356 = vst.msk [vmem:[#allocation8 + $0x28] sm:$0xff] %vm350, %v347
    %357 = vst.msk [vmem:[#allocation8 + $0x30] sm:$0xff] %vm350, %v348
    %358 = vst.msk [vmem:[#allocation8 + $0x38] sm:$0xff] %vm350, %v349
    %367 = vrot.lane.b32.xlu0 %v342, 80
    %v368 = vpop.permute.xlu0 %367
    %369 = vrot.lane.b32.xlu0 %v343, 80
    %v370 = vpop.permute.xlu0 %369
    %371 = vrot.lane.b32.xlu0 %v344, 80
    %v372 = vpop.permute.xlu0 %371
    %373 = vrot.lane.b32.xlu0 %v345, 80
    %v374 = vpop.permute.xlu0 %373
    %375 = vrot.lane.b32.xlu0 %v346, 80
    %v376 = vpop.permute.xlu0 %375
    %377 = vrot.lane.b32.xlu0 %v347, 80
    %v378 = vpop.permute.xlu0 %377
    %379 = vrot.lane.b32.xlu0 %v348, 80
    %v380 = vpop.permute.xlu0 %379
    %381 = vrot.lane.b32.xlu0 %v349, 80
    %v382 = vpop.permute.xlu0 %381
    %s391 = scalar_lea.vmem [#allocation8], 64
    %392 = vst.msk [vmem:[%s391] sm:$0xff] %vm350, %v368
    %393 = vst.msk [vmem:[%s391 + $0x8] sm:$0xff] %vm350, %v370
    %394 = vst.msk [vmem:[%s391 + $0x10] sm:$0xff] %vm350, %v372
    %395 = vst.msk [vmem:[%s391 + $0x18] sm:$0xff] %vm350, %v374
    %396 = vst.msk [vmem:[%s391 + $0x20] sm:$0xff] %vm350, %v376
    %397 = vst.msk [vmem:[%s391 + $0x28] sm:$0xff] %vm350, %v378
    %398 = vst.msk [vmem:[%s391 + $0x30] sm:$0xff] %vm350, %v380
    %399 = vst.msk [vmem:[%s391 + $0x38] sm:$0xff] %vm350, %v382
    // Predicated region
    $region26: #{gru_encoder_forward.6} parent=1 // pred_check
      _
    $region27: #{gru_encoder_forward.6} parent=1 // pred_check_branch
      %401 = sbr.rel (0) target = $region29
    $region28: #{gru_encoder_forward.6} parent=1 // pred_region
      %s403 = ssub.s32 2048, 2048
      %404 = vsyncadd [#allocation4], %s403
      %s405 = sshll.u32 [#allocation8], 4
      %s406 = int_to_ptr.vmem [resolvable:$true] %s405
      %411 = dma.vmem_to_hbm [thread:$0]  %s406, 2048, %s3, [#allocation4], 128, 128, 8
    $region29: #{gru_encoder_forward.6} parent=1 // pred_fallthru
      _
    // Predicated region
    $region30: #{gru_encoder_forward.6} parent=1 // pred_check
      _
    $region31: #{gru_encoder_forward.6} parent=1 // pred_check_branch
      %413 = sbr.rel (0) target = $region33
    $region32: #{gru_encoder_forward.6} parent=1 // pred_region
      %414 = dma.done [#allocation4], 2048
    $region33: #{gru_encoder_forward.6} parent=1 // pred_fallthru
      _
    %415 = vsyncpa [#allocation3], 1
    %416 = vsyncpa [#allocation6], 1
    %417 = vsyncpa [#allocation4], 1

// kernel: gru_encoder_forward.5
$region0: #{gru_encoder_forward.5}
  #allocation0 [shape = 'u32[]', space=smem, size = 0x4, offset = 0x4, fixed_abs, tag = 'smem constant byte address 0x4 - core index']
  #allocation1 [shape = 'u32[144,128]{1,0:T(1,128)}', space=vmem, size = 0x12000, scoped, tag = 'internal scratch']
  #allocation2 [shape = 'f32[8,16]{1,0:T(8,128)}', space=vmem, size = 0x1000, scoped, tag = 'scratch operand']
  %s0 = inlined_call_operand.hbm [shape: f32[2,8,8,48], index: 0, kind: input, shape index: {}]
  %s1 = inlined_call_operand.hbm [shape: f32[2,16,48], index: 1, kind: input, shape index: {}]
  %s2 = inlined_call_operand.hbm [shape: f32[2,1,16], index: 2, kind: input, shape index: {}]
  %s3 = inlined_call_operand.hbm [shape: f32[2,8,8,16], index: 3, kind: output, shape index: {}]
  %s4 = sld [smem:[#allocation0]]
  $region61: #{gru_encoder_forward.5} parent=0
    _
  %s6 = ssub.s32 1, %s4
  %s7 = scalar_select 0, %s6, %s4
  $region1: #{gru_encoder_forward.5} parent=0
    #allocation3 [shape = 'u8[65536]{0}', space=vmem, size = 0x10000, scoped, tag = 'input window, operand 0']
    #allocation4 [shape = 's32[2]{0}', space=sflag, size = 0x8, scoped, tag = 'scoped memory for gru_encoder_forward.5']
    #allocation5 [shape = 's32[2]{0}', space=sflag, size = 0x8, scoped, tag = 'scoped memory for gru_encoder_forward.5']
    #allocation6 [shape = 'u8[16384]{0}', space=vmem, size = 0x4000, scoped, tag = 'input window, operand 1']
    #allocation7 [shape = 's32[2]{0}', space=sflag, size = 0x8, scoped, tag = 'scoped memory for gru_encoder_forward.5']
    #allocation8 [shape = 'u8[1024]{0}', space=vmem, size = 0x400, scoped, tag = 'input window, operand 2']
    #allocation9 [shape = 'u8[65536]{0}', space=vmem, size = 0x10000, scoped, tag = 'output window, operand 0']
    %8 = vsyncpa [#allocation4], 0
    %s9 = scalar_lea.sflag [#allocation4], 1
    %10 = vsyncpa %s9, 0
    %11 = vsyncpa [#allocation7], 0
    %s12 = scalar_lea.sflag [#allocation7], 1
    %13 = vsyncpa %s12, 0
    %14 = vsyncpa [#allocation5], 0
    %s15 = scalar_lea.sflag [#allocation5], 1
    %16 = vsyncpa %s15, 0
    loop: start=0, step=1, limit=4
    $region2: #{gru_encoder_forward.5} parent=1 // loop_pre_header
      _
    $region3: #{gru_encoder_forward.5} parent=1 // loop_header
      %s18 = sphi 0, %s22
      %p19 = scmp.ge.s32.totalorder %s18, 4
      %s25 = sphi 0, %s37
      %s26 = sphi 0, %s33
      %s27 = sphi 0, %s25
      %s28 = sphi 0, %s26
      %s29 = sphi 0, %s27
      %s30 = sphi 0, %s28
      %s50 = sphi 0, %s52
      %s53 = sphi 0, %s50
      %s54 = sphi 0, %s53
      %s70 = sphi 0, %s54
      %s76 = sphi 0, %s78
      %s79 = sphi 0, %s76
      %s80 = sphi 0, %s79
      %s96 = sphi 0, %s80
      %s102 = sphi 0, %s104
      %s105 = sphi 0, %s102
      %s106 = sphi 0, %s105
      %s122 = sphi 0, %s106
      %s138 = sphi 0, %s140
      %s141 = sphi 0, %s138
      %s142 = sphi 0, %s141
      %s158 = sphi 0, %s142
    $region4: #{gru_encoder_forward.5} parent=1 // loop_header_branch
      %21 = sbr.rel (%p19) target = $region8
    $region5: #{gru_encoder_forward.5} parent=1 // loop_body
      %s23 = ssub.s32 %s18, 1
      %s24 = ssub.s32 %s18, 2
      %s31 = sadd.s32 1, %s26
      %p32 = scmp.ge.s32.totalorder %s31, 1
      %s33 = scalar_select %p32, 0, %s31
      %s34 = sadd.s32 1, %s25
      %s35 = scalar_select %p32, %s34, %s25
      %p36 = scmp.ge.s32.totalorder %s35, 2
      %s37 = scalar_select %p36, 0, %s35
      %s38 = smul.u32 %s26, 2
      %s39 = ssub.s32 0, %s38
      %s40 = smul.u32 %s25, %s39
      %s41 = sadd.s32 %s26, %s40
      %s42 = smul.u32 %s33, 2
      %s43 = ssub.s32 0, %s42
      %s44 = smul.u32 %s37, %s43
      %s45 = sadd.s32 %s33, %s44
      %s46 = ssub.s32 %s25, %s37
      %s47 = ssub.s32 %s41, %s45
      %s48 = sor.u32 %s46, %s47
      %p49 = scmp.eq.s32.totalorder %s48, 0
      %s51 = sadd.s32 %s50, 1
      %s52 = scalar_select %p49, %s50, %s51
      %p55 = pneg %p49
      %p56 = scmp.eq.s32.totalorder %s18, 1
      %p57 = por %p55, %p56
      %p58 = scmp.ne.s32.totalorder %s50, %s53
      %p59 = scmp.eq.s32.totalorder %s18, 0
      %p60 = por %p58, %p59
      %p61 = scmp.ne.s32.totalorder %s50, %s53
      %p62 = scmp.eq.s32.totalorder %s23, 1
      %p63 = por %p61, %p62
      %p64 = scmp.ne.s32.totalorder %s53, %s54
      %p65 = scmp.eq.s32.totalorder %s23, 0
      %p66 = por %p64, %p65
      %p67 = scmp.ne.s32.totalorder %s53, %s54
      %p68 = scmp.eq.s32.totalorder %s24, 1
      %p69 = por %p67, %p68
      %p71 = scmp.ne.s32.totalorder %s54, %s70
      %p72 = scmp.eq.s32.totalorder %s24, 0
      %p73 = por %p71, %p72
      %s74 = ssub.s32 %s25, %s37
      %p75 = scmp.eq.s32.totalorder %s74, 0
      %s77 = sadd.s32 %s76, 1
      %s78 = scalar_select %p75, %s76, %s77
      %p81 = pneg %p75
      %p82 = scmp.eq.s32.totalorder %s18, 1
      %p83 = por %p81, %p82
      %p84 = scmp.ne.s32.totalorder %s76, %s79
      %p85 = scmp.eq.s32.totalorder %s18, 0
      %p86 = por %p84, %p85
      %p87 = scmp.ne.s32.totalorder %s76, %s79
      %p88 = scmp.eq.s32.totalorder %s23, 1
      %p89 = por %p87, %p88
      %p90 = scmp.ne.s32.totalorder %s79, %s80
      %p91 = scmp.eq.s32.totalorder %s23, 0
      %p92 = por %p90, %p91
      %p93 = scmp.ne.s32.totalorder %s79, %s80
      %p94 = scmp.eq.s32.totalorder %s24, 1
      %p95 = por %p93, %p94
      %p97 = scmp.ne.s32.totalorder %s80, %s96
      %p98 = scmp.eq.s32.totalorder %s24, 0
      %p99 = por %p97, %p98
      %s100 = ssub.s32 %s25, %s37
      %p101 = scmp.eq.s32.totalorder %s100, 0
      %s103 = sadd.s32 %s102, 1
      %s104 = scalar_select %p101, %s102, %s103
      %p107 = pneg %p101
      %p108 = scmp.eq.s32.totalorder %s18, 1
      %p109 = por %p107, %p108
      %p110 = scmp.ne.s32.totalorder %s102, %s105
      %p111 = scmp.eq.s32.totalorder %s18, 0
      %p112 = por %p110, %p111
      %p113 = scmp.ne.s32.totalorder %s102, %s105
      %p114 = scmp.eq.s32.totalorder %s23, 1
      %p115 = por %p113, %p114
      %p116 = scmp.ne.s32.totalorder %s105, %s106
      %p117 = scmp.eq.s32.totalorder %s23, 0
      %p118 = por %p116, %p117
      %p119 = scmp.ne.s32.totalorder %s105, %s106
      %p120 = scmp.eq.s32.totalorder %s24, 1
      %p121 = por %p119, %p120
      %p123 = scmp.ne.s32.totalorder %s106, %s122
      %p124 = scmp.eq.s32.totalorder %s24, 0
      %p125 = por %p123, %p124
      %s126 = smul.u32 %s26, 2
      %s127 = ssub.s32 0, %s126
      %s128 = smul.u32 %s25, %s127
      %s129 = sadd.s32 %s26, %s128
      %s130 = smul.u32 %s33, 2
      %s131 = ssub.s32 0, %s130
      %s132 = smul.u32 %s37, %s131
      %s133 = sadd.s32 %s33, %s132
      %s134 = ssub.s32 %s25, %s37
      %s135 = ssub.s32 %s129, %s133
      %s136 = sor.u32 %s134, %s135
      %p137 = scmp.eq.s32.totalorder %s136, 0
      %s139 = sadd.s32 %s138, 1
      %s140 = scalar_select %p137, %s138, %s139
      %p143 = pneg %p137
      %p144 = scmp.eq.s32.totalorder %s18, 1
      %p145 = por %p143, %p144
      %p146 = scmp.ne.s32.totalorder %s138, %s141
      %p147 = scmp.eq.s32.totalorder %s18, 0
      %p148 = por %p146, %p147
      %p149 = scmp.ne.s32.totalorder %s138, %s141
      %p150 = scmp.eq.s32.totalorder %s23, 1
      %p151 = por %p149, %p150
      %p152 = scmp.ne.s32.totalorder %s141, %s142
      %p153 = scmp.eq.s32.totalorder %s23, 0
      %p154 = por %p152, %p153
      %p155 = scmp.ne.s32.totalorder %s141, %s142
      %p156 = scmp.eq.s32.totalorder %s24, 1
      %p157 = por %p155, %p156
      %p159 = scmp.ne.s32.totalorder %s142, %s158
      %p160 = scmp.eq.s32.totalorder %s24, 0
      %p161 = por %p159, %p160
      %p162 = scmp.le.s32.totalorder 1, %s18
      %p163 = scmp.lt.s32.totalorder %s18, 3
      %p164 = pnand %p162, %p163
      %p165 = pneg %p164
      // Predicated region
      $region9: #{gru_encoder_forward.5} parent=5 // pred_check
        _
      $region10: #{gru_encoder_forward.5} parent=5 // pred_check_branch
        %167 = sbr.rel (%p164) target = $region12
      $region11: #{gru_encoder_forward.5} parent=5 // pred_region
        %s168 = ssub.s32 %s18, 1
      $region12: #{gru_encoder_forward.5} parent=5 // pred_fallthru
        _
      %p169 = scmp.lt.s32.totalorder %s18, 2
      // Predicated region
      $region13: #{gru_encoder_forward.5} parent=5 // pred_check
        %p170 = pneg %p169
      $region14: #{gru_encoder_forward.5} parent=5 // pred_check_branch
        %172 = sbr.rel (%p170) target = $region16
      $region15: #{gru_encoder_forward.5} parent=5 // pred_region
        // Predicated region
        $region17: #{gru_encoder_forward.5} parent=15 // pred_check
          %p173 = pneg %p60
        $region18: #{gru_encoder_forward.5} parent=15 // pred_check_branch
          %175 = sbr.rel (%p173) target = $region20
        $region19: #{gru_encoder_forward.5} parent=15 // pred_region
          %s176 = sand.u32 %s50, 1
          %s177 = scalar_lea.sflag [#allocation4], %s176
          %s178 = sand.u32 %s50, 1
          %s179 = smul.addr %s178, 64
          %s180 = scalar_lea.vmem [#allocation3], %s179
          %s181 = smul.u32 %s26, 2
          %s182 = ssub.s32 0, %s181
          %s183 = smul.u32 %s25, %s182
          %s184 = sadd.s32 %s26, %s183
          %s185 = smul.u32 8, %s184
          %s187 = ssub.s32 1024, 1024
          %188 = vsyncadd %s177, %s187
          %s189 = smul.addr %s25, 8
          %s190 = sadd.s32 %s185, %s189
          %s191 = smul.addr %s190, 128
          %s192 = scalar_lea.hbm %s0, %s191
          %s193 = sshll.u32 %s180, 4
          %s194 = int_to_ptr.vmem [resolvable:$true] %s193
          %199 = dma.hbm_to_vmem [thread:$0]  %s192, 1024, %s194, %s177, 128, 128, 8
        $region20: #{gru_encoder_forward.5} parent=15 // pred_fallthru
          _
        // Predicated region
        $region21: #{gru_encoder_forward.5} parent=15 // pred_check
          %p200 = pneg %p86
        $region22: #{gru_encoder_forward.5} parent=15 // pred_check_branch
          %202 = sbr.rel (%p200) target = $region24
        $region23: #{gru_encoder_forward.5} parent=15 // pred_region
          %s203 = sand.u32 %s18, 1
          %s204 = scalar_lea.sflag [#allocation7], %s203
          %s205 = sand.u32 %s76, 1
          %s206 = smul.addr %s205, 16
          %s207 = scalar_lea.vmem [#allocation6], %s206
          %s209 = ssub.s32 256, 256
          %210 = vsyncadd %s204, %s209
          %s211 = smul.addr %s25, 2
          %s212 = smul.addr %s211, 128
          %s213 = scalar_lea.hbm %s1, %s212
          %s214 = sshll.u32 %s207, 4
          %s215 = int_to_ptr.vmem [resolvable:$true] %s214
          %220 = dma.hbm_to_vmem [thread:$0]  %s213, 256, %s215, %s204, 128, 128, 8
        $region24: #{gru_encoder_forward.5} parent=15 // pred_fallthru
          _
        // Predicated region
        $region25: #{gru_encoder_forward.5} parent=15 // pred_check
          %p221 = pneg %p112
        $region26: #{gru_encoder_forward.5} parent=15 // pred_check_branch
          %223 = sbr.rel (%p221) target = $region28
        $region27: #{gru_encoder_forward.5} parent=15 // pred_region
          %s224 = sand.u32 %s18, 1
          %s225 = scalar_lea.sflag [#allocation7], %s224
          %s226 = sand.u32 %s102, 1
          %s227 = scalar_lea.vmem [#allocation8], %s226
          %s229 = ssub.s32 16, 16
          %230 = vsyncadd %s225, %s229
          %s231 = smul.addr %s25, 16
          %s232 = scalar_lea.hbm %s2, %s231
          %s234 = sshll.u32 %s227, 4
          %s235 = int_to_ptr.vmem [resolvable:$true] %s234
          %237 = dma.hbm_to_vmem [thread:$0]  %s232, 16, %s235, %s225
        $region28: #{gru_encoder_forward.5} parent=15 // pred_fallthru
          _
      $region16: #{gru_encoder_forward.5} parent=5 // pred_fallthru
        _
      %p238 = scmp.le.s32.totalorder 1, %s18
      %p239 = scmp.lt.s32.totalorder %s18, 3
      %p240 = pnand %p238, %p239
      %p241 = pneg %p240
      // Predicated region
      $region29: #{gru_encoder_forward.5} parent=5 // pred_check
        _
      $region30: #{gru_encoder_forward.5} parent=5 // pred_check_branch
        %243 = sbr.rel (%p240) target = $region32
      $region31: #{gru_encoder_forward.5} parent=5 // pred_region
        %s244 = ssub.s32 %s18, 1
        %s245 = sand.u32 %s53, 1
        %s246 = scalar_lea.sflag [#allocation4], %s245
        %s247 = sand.u32 %s53, 1
        %s248 = smul.addr %s247, 64
        %s249 = scalar_lea.vmem [#allocation3], %s248
        // Predicated region
        $region33: #{gru_encoder_forward.5} parent=31 // pred_check
          %p250 = pneg %p66
        $region34: #{gru_encoder_forward.5} parent=31 // pred_check_branch
          %252 = sbr.rel (%p250) target = $region36
        $region35: #{gru_encoder_forward.5} parent=31 // pred_region
          %253 = dma.done %s246, 1024
        $region36: #{gru_encoder_forward.5} parent=31 // pred_fallthru
          _
        %s254 = sand.u32 %s23, 1
        %s255 = scalar_lea.sflag [#allocation7], %s254
        %s256 = sand.u32 %s79, 1
        %s257 = smul.addr %s256, 16
        %s258 = scalar_lea.vmem [#allocation6], %s257
        // Predicated region
        $region37: #{gru_encoder_forward.5} parent=31 // pred_check
          %p259 = pneg %p92
        $region38: #{gru_encoder_forward.5} parent=31 // pred_check_branch
          %261 = sbr.rel (%p259) target = $region40
        $region39: #{gru_encoder_forward.5} parent=31 // pred_region
          %262 = dma.done %s255, 256
        $region40: #{gru_encoder_forward.5} parent=31 // pred_fallthru
          _
        %s263 = sand.u32 %s23, 1
        %s264 = scalar_lea.sflag [#allocation7], %s263
        %s265 = sand.u32 %s105, 1
        %s266 = scalar_lea.vmem [#allocation8], %s265
        // Predicated region
        $region41: #{gru_encoder_forward.5} parent=31 // pred_check
          %p267 = pneg %p118
        $region42: #{gru_encoder_forward.5} parent=31 // pred_check_branch
          %269 = sbr.rel (%p267) target = $region44
        $region43: #{gru_encoder_forward.5} parent=31 // pred_region
          %270 = dma.done %s264, 16
        $region44: #{gru_encoder_forward.5} parent=31 // pred_fallthru
          _
        %s271 = sand.u32 %s53, 1
        %s272 = scalar_lea.sflag [#allocation4], %s271
        %s273 = sand.u32 %s53, 1
        %s274 = smul.addr %s273, 64
        %s275 = scalar_lea.vmem [#allocation3], %s274
        %p276 = pneg %p66
        %p277 = pneg %p63
        %s278 = sand.u32 %s23, 1
        %s279 = scalar_lea.sflag [#allocation7], %s278
        %s280 = sand.u32 %s79, 1
        %s281 = smul.addr %s280, 16
        %s282 = scalar_lea.vmem [#allocation6], %s281
        %p283 = pneg %p92
        %p284 = pneg %p89
        %s285 = sand.u32 %s23, 1
        %s286 = scalar_lea.sflag [#allocation7], %s285
        %s287 = sand.u32 %s105, 1
        %s288 = scalar_lea.vmem [#allocation8], %s287
        %p289 = pneg %p118
        %p290 = pneg %p115
        %p291 = pneg %p154
        %p292 = pneg %p151
        %s293 = sand.u32 %s141, 1
        %s294 = scalar_lea.sflag [#allocation5], %s293
        %s295 = sand.u32 %s141, 1
        %s296 = smul.addr %s295, 64
        %s297 = scalar_lea.vmem [#allocation9], %s296
        %s298 = smul.u32 %s28, 2
        %s299 = ssub.s32 0, %s298
        %s300 = smul.u32 %s27, %s299
        %s301 = sadd.s32 %s28, %s300
        %s302 = smul.u32 8, %s301
        %s303 = smul.u32 %s28, 2
        %s304 = ssub.s32 0, %s303
        %s305 = smul.u32 %s27, %s304
        %s306 = sadd.s32 %s28, %s305
        %s307 = smul.u32 8, %s306
        %p308 = scmp.eq.s32.totalorder %s28, 0
        // Predicated region
        $region45: #{gru_encoder_forward.5} parent=31 // pred_check
          %p309 = pneg %p308
        $region46: #{gru_encoder_forward.5} parent=31 // pred_check_branch
          %311 = sbr.rel (%p309) target = $region48
        $region47: #{gru_encoder_forward.5} parent=31 // pred_region
          %vm312 = vcmask 130048
          %313 = vst.msk [vmem:[#allocation2] sm:$0xff] %vm312, 0.0
        $region48: #{gru_encoder_forward.5} parent=31 // pred_fallthru
          _
        %v314 = vld [vmem:[%s258] sm:$0xff]
        %v315 = vld [vmem:[%s258 + $0x8] sm:$0xff]
        %v316 = vld [vmem:[%s266] sm:$0x1]
        %s317 = smul.u32 %s27, 7
        %v318 = vld [vmem:[#allocation2] sm:$0xff]
        %vm319 = vcmask 130048
        %v321 = vsel %vm319, %v318, 0
        %323 = vmatprep.subr.mxu0 0.0
        %324 = vmatpush1.msra.mxu0 %v314
        %325 = vmatprep.subr.mxu0 0.0
        %326 = vmatpush1.msra.mxu0 %v315
        %327 = vmatprep.subr.mxu0 0.0
        %328 = vmatpush1.msra.mxu0 0.0
        %329 = vmatprep.subr.mxu0 0.0
        %330 = vmatpush1.msra.mxu0 0.0
        %331 = vmatprep.subr.mxu0 0.0
        %332 = vmatpush1.msra.mxu0 0.0
        %333 = vmatprep.subr.mxu0 0.0
        %334 = vmatpush1.msra.mxu0 0.0
        %335 = vmatprep.subr.mxu0 0.0
        %336 = vmatpush1.msra.mxu0 0.0
        %337 = vmatprep.subr.mxu0 0.0
        %338 = vmatpush1.msra.mxu0 0.0
        %339 = vmatprep.subr.mxu0 0.0
        %340 = vmatpush1.msra.mxu0 0.0
        %341 = vmatprep.subr.mxu0 0.0
        %342 = vmatpush1.msra.mxu0 0.0
        %343 = vmatprep.subr.mxu0 0.0
        %344 = vmatpush1.msra.mxu0 0.0
        %345 = vmatprep.subr.mxu0 0.0
        %346 = vmatpush1.msra.mxu0 0.0
        %347 = vmatprep.subr.mxu0 0.0
        %348 = vmatpush1.msra.mxu0 0.0
        %349 = vmatprep.subr.mxu0 0.0
        %350 = vmatpush1.msra.mxu0 0.0
        %351 = vmatprep.subr.mxu0 0.0
        %352 = vmatpush1.msra.mxu0 0.0
        %353 = vmatprep.subr.mxu0 0.0
        %354 = vmatpush1.msra.mxu0 0.0
        %355 = vmatprep.subr.mxu0 0.0
        %356 = vmatpush1.msra.mxu0 0.0
        %357 = vmatprep.subr.mxu0 0.0
        %358 = vmatpush1.msra.mxu0 0.0
        %359 = vmatprep.subr.mxu0 0.0
        %360 = vmatpush1.msra.mxu0 0.0
        %361 = vmatprep.subr.mxu0 0.0
        %362 = vmatpush1.msra.mxu0 0.0
        %363 = vmatprep.subr.mxu0 0.0
        %364 = vmatpush1.msra.mxu0 0.0
        %365 = vmatprep.subr.mxu0 0.0
        %366 = vmatpush1.msra.mxu0 0.0
        %367 = vmatprep.subr.mxu0 0.0
        %368 = vmatpush1.msra.mxu0 0.0
        %369 = vmatprep.subr.mxu0 0.0
        %370 = vmatpush1.msra.mxu0 0.0
        %371 = vmatprep.subr.mxu0 0.0
        %372 = vmatpush1.msra.mxu0 0.0
        %373 = vmatprep.subr.mxu0 0.0
        %374 = vmatpush1.msra.mxu0 0.0
        %375 = vmatprep.subr.mxu0 0.0
        %376 = vmatpush1.msra.mxu0 0.0
        %377 = vmatprep.subr.mxu0 0.0
        %378 = vmatpush1.msra.mxu0 0.0
        %379 = vmatprep.subr.mxu0 0.0
        %380 = vmatpush1.msra.mxu0 0.0
        %381 = vmatprep.subr.mxu0 0.0
        %382 = vmatpush1.msra.mxu0 0.0
        %383 = vmatprep.subr.mxu0 0.0
        %384 = vmatpush1.msra.mxu0 0.0
        %385 = vmatprep.subr.mxu0 0.0
        %386 = vmatpush1.msra.mxu0 0.0
        %387 = vmatprep.mubr.f32.mxu0 0.0
        %388 = vmatmul.mubr.f32.gmra.mrb[0].mxu0 %v321
        %v389 = vpop.f32.mrb[0].mxu0
        %v390 = vadd.f32 0.0, %v389
        %v391 = vpop.f32.mrb[0].mxu0
        %392 = vdwg.mxu0
        %s393 = smul.u32 %s317, 8
        %s394 = scalar_lea.vmem %s249, %s393 [#allocation3]
        %v395 = vld [vmem:[%s394] sm:$0xff]
        %v396 = vadd.f32 %v395, %v390
        %v397 = vxor.u32 %v396, 2147483648
        %v398 = vmul.f32 %v397, 1.442695
        %v399 = vpow.pop %v398
        %v400 = vadd.f32 %v399, 1.0
        %v401 = vrcp.pop %v400
        %v402 = vmul.f32 1.0, %v401
        %v404 = vlaneseq
        %v405 = vshrl.u32 %v404, 7
        %v406 = vsub.s32 0, %v405
        %v407 = vrot.slane %v316, %v406
        %408 = vrot.lane.b32.xlu0 %v407, 32
        %v409 = vpop.permute.xlu0 %408
        %v411 = vadd.f32 %v390, %v409
        %413 = vrot.lane.b32.xlu0 %v411, 96
        %v414 = vpop.permute.xlu0 %413
        %v416 = vmul.f32 %v402, %v414
        %418 = vrot.lane.b32.xlu0 %v416, 32
        %v419 = vpop.permute.xlu0 %418
        %v421 = vadd.f32 %v395, %v419
        %v422 = vtanh.pop %v421
        %v423 = vsub.f32 1.0, %v402
        %425 = vrot.lane.b32.xlu0 %v422, 112
        %v426 = vpop.permute.xlu0 %425
        %v428 = vmul.f32 %v423, %v426
        %429 = vrot.lane.b32.xlu0 %v318, 16
        %v430 = vpop.permute.xlu0 %429
        %v432 = vmul.f32 %v402, %v430
        %v433 = vadd.f32 %v428, %v432
        %435 = vrot.lane.b32.xlu0 %v433, 112
        %v436 = vpop.permute.xlu0 %435
        %438 = vst.msk [vmem:[#allocation2] sm:$0xff] %vm319, %v436
        %s439 = scalar_lea.vmem %s297, %s393 [#allocation9]
        %440 = vst.msk [vmem:[%s439] sm:$0xff] %vm319, %v436
        %s441 = smul.u32 %s27, 5
        %s442 = sadd.s32 %s441, 1
        %v443 = vld [vmem:[#allocation2] sm:$0xff]
        %v445 = vsel %vm319, %v443, 0
        %447 = vmatprep.subr.mxu0 0.0
        %448 = vmatpush1.msra.mxu0 %v314
        %449 = vmatprep.subr.mxu0 0.0
        %450 = vmatpush1.msra.mxu0 %v315
        %451 = vmatprep.subr.mxu0 0.0
        %452 = vmatpush1.msra.mxu0 0.0
        %453 = vmatprep.subr.mxu0 0.0
        %454 = vmatpush1.msra.mxu0 0.0
        %455 = vmatprep.subr.mxu0 0.0
        %456 = vmatpush1.msra.mxu0 0.0
        %457 = vmatprep.subr.mxu0 0.0
        %458 = vmatpush1.msra.mxu0 0.0
        %459 = vmatprep.subr.mxu0 0.0
        %460 = vmatpush1.msra.mxu0 0.0
        %461 = vmatprep.subr.mxu0 0.0
        %462 = vmatpush1.msra.mxu0 0.0
        %463 = vmatprep.subr.mxu0 0.0
        %464 = vmatpush1.msra.mxu0 0.0
        %465 = vmatprep.subr.mxu0 0.0
        %466 = vmatpush1.msra.mxu0 0.0
        %467 = vmatprep.subr.mxu0 0.0
        %468 = vmatpush1.msra.mxu0 0.0
        %469 = vmatprep.subr.mxu0 0.0
        %470 = vmatpush1.msra.mxu0 0.0
        %471 = vmatprep.subr.mxu0 0.0
        %472 = vmatpush1.msra.mxu0 0.0
        %473 = vmatprep.subr.mxu0 0.0
        %474 = vmatpush1.msra.mxu0 0.0
        %475 = vmatprep.subr.mxu0 0.0
        %476 = vmatpush1.msra.mxu0 0.0
        %477 = vmatprep.subr.mxu0 0.0
        %478 = vmatpush1.msra.mxu0 0.0
        %479 = vmatprep.subr.mxu0 0.0
        %480 = vmatpush1.msra.mxu0 0.0
        %481 = vmatprep.subr.mxu0 0.0
        %482 = vmatpush1.msra.mxu0 0.0
        %483 = vmatprep.subr.mxu0 0.0
        %484 = vmatpush1.msra.mxu0 0.0
        %485 = vmatprep.subr.mxu0 0.0
        %486 = vmatpush1.msra.mxu0 0.0
        %487 = vmatprep.subr.mxu0 0.0
        %488 = vmatpush1.msra.mxu0 0.0
        %489 = vmatprep.subr.mxu0 0.0
        %490 = vmatpush1.msra.mxu0 0.0
        %491 = vmatprep.subr.mxu0 0.0
        %492 = vmatpush1.msra.mxu0 0.0
        %493 = vmatprep.subr.mxu0 0.0
        %494 = vmatpush1.msra.mxu0 0.0
        %495 = vmatprep.subr.mxu0 0.0
        %496 = vmatpush1.msra.mxu0 0.0
        %497 = vmatprep.subr.mxu0 0.0
        %498 = vmatpush1.msra.mxu0 0.0
        %499 = vmatprep.subr.mxu0 0.0
        %500 = vmatpush1.msra.mxu0 0.0
        %501 = vmatprep.subr.mxu0 0.0
        %502 = vmatpush1.msra.mxu0 0.0
        %503 = vmatprep.subr.mxu0 0.0
        %504 = vmatpush1.msra.mxu0 0.0
        %505 = vmatprep.subr.mxu0 0.0
        %506 = vmatpush1.msra.mxu0 0.0
        %507 = vmatprep.subr.mxu0 0.0
        %508 = vmatpush1.msra.mxu0 0.0
        %509 = vmatprep.subr.mxu0 0.0
        %510 = vmatpush1.msra.mxu0 0.0
        %511 = vmatprep.mubr.f32.mxu0 0.0
        %512 = vmatmul.mubr.f32.gmra.mrb[0].mxu0 %v445
        %v513 = vpop.f32.mrb[0].mxu0
        %v514 = vadd.f32 0.0, %v513
        %v515 = vpop.f32.mrb[0].mxu0
        %516 = vdwg.mxu0
        %s517 = smul.u32 %s442, 8
        %s518 = scalar_lea.vmem %s249, %s517 [#allocation3]
        %v519 = vld [vmem:[%s518] sm:$0xff]
        %v520 = vadd.f32 %v519, %v514
        %v521 = vxor.u32 %v520, 2147483648
        %v522 = vmul.f32 %v521, 1.442695
        %v523 = vpow.pop %v522
        %v524 = vadd.f32 %v523, 1.0
        %v525 = vrcp.pop %v524
        %v526 = vmul.f32 1.0, %v525
        %v527 = vadd.f32 %v514, %v409
        %529 = vrot.lane.b32.xlu0 %v527, 96
        %v530 = vpop.permute.xlu0 %529
        %v532 = vmul.f32 %v526, %v530
        %534 = vrot.lane.b32.xlu0 %v532, 32
        %v535 = vpop.permute.xlu0 %534
        %v537 = vadd.f32 %v519, %v535
        %v538 = vtanh.pop %v537
        %v539 = vsub.f32 1.0, %v526
        %541 = vrot.lane.b32.xlu0 %v538, 112
        %v542 = vpop.permute.xlu0 %541
        %v544 = vmul.f32 %v539, %v542
        %545 = vrot.lane.b32.xlu0 %v443, 16
        %v546 = vpop.permute.xlu0 %545
        %v548 = vmul.f32 %v526, %v546
        %v549 = vadd.f32 %v544, %v548
        %551 = vrot.lane.b32.xlu0 %v549, 112
        %v552 = vpop.permute.xlu0 %551
        %554 = vst.msk [vmem:[#allocation2] sm:$0xff] %vm319, %v552
        %s555 = scalar_lea.vmem %s297, %s517 [#allocation9]
        %556 = vst.msk [vmem:[%s555] sm:$0xff] %vm319, %v552
        %s557 = smul.u32 %s27, 3
        %s558 = sadd.s32 %s557, 2
        %v559 = vld [vmem:[#allocation2] sm:$0xff]
        %v561 = vsel %vm319, %v559, 0
        %563 = vmatprep.subr.mxu0 0.0
        %564 = vmatpush1.msra.mxu0 %v314
        %565 = vmatprep.subr.mxu0 0.0
        %566 = vmatpush1.msra.mxu0 %v315
        %567 = vmatprep.subr.mxu0 0.0
        %568 = vmatpush1.msra.mxu0 0.0
        %569 = vmatprep.subr.mxu0 0.0
        %570 = vmatpush1.msra.mxu0 0.0
        %571 = vmatprep.subr.mxu0 0.0
        %572 = vmatpush1.msra.mxu0 0.0
        %573 = vmatprep.subr.mxu0 0.0
        %574 = vmatpush1.msra.mxu0 0.0
        %575 = vmatprep.subr.mxu0 0.0
        %576 = vmatpush1.msra.mxu0 0.0
        %577 = vmatprep.subr.mxu0 0.0
        %578 = vmatpush1.msra.mxu0 0.0
        %579 = vmatprep.subr.mxu0 0.0
        %580 = vmatpush1.msra.mxu0 0.0
        %581 = vmatprep.subr.mxu0 0.0
        %582 = vmatpush1.msra.mxu0 0.0
        %583 = vmatprep.subr.mxu0 0.0
        %584 = vmatpush1.msra.mxu0 0.0
        %585 = vmatprep.subr.mxu0 0.0
        %586 = vmatpush1.msra.mxu0 0.0
        %587 = vmatprep.subr.mxu0 0.0
        %588 = vmatpush1.msra.mxu0 0.0
        %589 = vmatprep.subr.mxu0 0.0
        %590 = vmatpush1.msra.mxu0 0.0
        %591 = vmatprep.subr.mxu0 0.0
        %592 = vmatpush1.msra.mxu0 0.0
        %593 = vmatprep.subr.mxu0 0.0
        %594 = vmatpush1.msra.mxu0 0.0
        %595 = vmatprep.subr.mxu0 0.0
        %596 = vmatpush1.msra.mxu0 0.0
        %597 = vmatprep.subr.mxu0 0.0
        %598 = vmatpush1.msra.mxu0 0.0
        %599 = vmatprep.subr.mxu0 0.0
        %600 = vmatpush1.msra.mxu0 0.0
        %601 = vmatprep.subr.mxu0 0.0
        %602 = vmatpush1.msra.mxu0 0.0
        %603 = vmatprep.subr.mxu0 0.0
        %604 = vmatpush1.msra.mxu0 0.0
        %605 = vmatprep.subr.mxu0 0.0
        %606 = vmatpush1.msra.mxu0 0.0
        %607 = vmatprep.subr.mxu0 0.0
        %608 = vmatpush1.msra.mxu0 0.0
        %609 = vmatprep.subr.mxu0 0.0
        %610 = vmatpush1.msra.mxu0 0.0
        %611 = vmatprep.subr.mxu0 0.0
        %612 = vmatpush1.msra.mxu0 0.0
        %613 = vmatprep.subr.mxu0 0.0
        %614 = vmatpush1.msra.mxu0 0.0
        %615 = vmatprep.subr.mxu0 0.0
        %616 = vmatpush1.msra.mxu0 0.0
        %617 = vmatprep.subr.mxu0 0.0
        %618 = vmatpush1.msra.mxu0 0.0
        %619 = vmatprep.subr.mxu0 0.0
        %620 = vmatpush1.msra.mxu0 0.0
        %621 = vmatprep.subr.mxu0 0.0
        %622 = vmatpush1.msra.mxu0 0.0
        %623 = vmatprep.subr.mxu0 0.0
        %624 = vmatpush1.msra.mxu0 0.0
        %625 = vmatprep.subr.mxu0 0.0
        %626 = vmatpush1.msra.mxu0 0.0
        %627 = vmatprep.mubr.f32.mxu0 0.0
        %628 = vmatmul.mubr.f32.gmra.mrb[0].mxu0 %v561
        %v629 = vpop.f32.mrb[0].mxu0
        %v630 = vadd.f32 0.0, %v629
        %v631 = vpop.f32.mrb[0].mxu0
        %632 = vdwg.mxu0
        %s633 = smul.u32 %s558, 8
        %s634 = scalar_lea.vmem %s249, %s633 [#allocation3]
        %v635 = vld [vmem:[%s634] sm:$0xff]
        %v636 = vadd.f32 %v635, %v630
        %v637 = vxor.u32 %v636, 2147483648
        %v638 = vmul.f32 %v637, 1.442695
        %v639 = vpow.pop %v638
        %v640 = vadd.f32 %v639, 1.0
        %v641 = vrcp.pop %v640
        %v642 = vmul.f32 1.0, %v641
        %v643 = vadd.f32 %v630, %v409
        %645 = vrot.lane.b32.xlu0 %v643, 96
        %v646 = vpop.permute.xlu0 %645
        %v648 = vmul.f32 %v642, %v646
        %650 = vrot.lane.b32.xlu0 %v648, 32
        %v651 = vpop.permute.xlu0 %650
        %v653 = vadd.f32 %v635, %v651
        %v654 = vtanh.pop %v653
        %v655 = vsub.f32 1.0, %v642
        %657 = vrot.lane.b32.xlu0 %v654, 112
        %v658 = vpop.permute.xlu0 %657
        %v660 = vmul.f32 %v655, %v658
        %661 = vrot.lane.b32.xlu0 %v559, 16
        %v662 = vpop.permute.xlu0 %661
        %v664 = vmul.f32 %v642, %v662
        %v665 = vadd.f32 %v660, %v664
        %667 = vrot.lane.b32.xlu0 %v665, 112
        %v668 = vpop.permute.xlu0 %667
        %670 = vst.msk [vmem:[#allocation2] sm:$0xff] %vm319, %v668
        %s671 = scalar_lea.vmem %s297, %s633 [#allocation9]
        %672 = vst.msk [vmem:[%s671] sm:$0xff] %vm319, %v668
        %s673 = sadd.s32 %s27, 3
        %v674 = vld [vmem:[#allocation2] sm:$0xff]
        %v676 = vsel %vm319, %v674, 0
        %678 = vmatprep.subr.mxu0 0.0
        %679 = vmatpush1.msra.mxu0 %v314
        %680 = vmatprep.subr.mxu0 0.0
        %681 = vmatpush1.msra.mxu0 %v315
        %682 = vmatprep.subr.mxu0 0.0
        %683 = vmatpush1.msra.mxu0 0.0
        %684 = vmatprep.subr.mxu0 0.0
        %685 = vmatpush1.msra.mxu0 0.0
        %686 = vmatprep.subr.mxu0 0.0
        %687 = vmatpush1.msra.mxu0 0.0
        %688 = vmatprep.subr.mxu0 0.0
        %689 = vmatpush1.msra.mxu0 0.0
        %690 = vmatprep.subr.mxu0 0.0
        %691 = vmatpush1.msra.mxu0 0.0
        %692 = vmatprep.subr.mxu0 0.0
        %693 = vmatpush1.msra.mxu0 0.0
        %694 = vmatprep.subr.mxu0 0.0
        %695 = vmatpush1.msra.mxu0 0.0
        %696 = vmatprep.subr.mxu0 0.0
        %697 = vmatpush1.msra.mxu0 0.0
        %698 = vmatprep.subr.mxu0 0.0
        %699 = vmatpush1.msra.mxu0 0.0
        %700 = vmatprep.subr.mxu0 0.0
        %701 = vmatpush1.msra.mxu0 0.0
        %702 = vmatprep.subr.mxu0 0.0
        %703 = vmatpush1.msra.mxu0 0.0
        %704 = vmatprep.subr.mxu0 0.0
        %705 = vmatpush1.msra.mxu0 0.0
        %706 = vmatprep.subr.mxu0 0.0
        %707 = vmatpush1.msra.mxu0 0.0
        %708 = vmatprep.subr.mxu0 0.0
        %709 = vmatpush1.msra.mxu0 0.0
        %710 = vmatprep.subr.mxu0 0.0
        %711 = vmatpush1.msra.mxu0 0.0
        %712 = vmatprep.subr.mxu0 0.0
        %713 = vmatpush1.msra.mxu0 0.0
        %714 = vmatprep.subr.mxu0 0.0
        %715 = vmatpush1.msra.mxu0 0.0
        %716 = vmatprep.subr.mxu0 0.0
        %717 = vmatpush1.msra.mxu0 0.0
        %718 = vmatprep.subr.mxu0 0.0
        %719 = vmatpush1.msra.mxu0 0.0
        %720 = vmatprep.subr.mxu0 0.0
        %721 = vmatpush1.msra.mxu0 0.0
        %722 = vmatprep.subr.mxu0 0.0
        %723 = vmatpush1.msra.mxu0 0.0
        %724 = vmatprep.subr.mxu0 0.0
        %725 = vmatpush1.msra.mxu0 0.0
        %726 = vmatprep.subr.mxu0 0.0
        %727 = vmatpush1.msra.mxu0 0.0
        %728 = vmatprep.subr.mxu0 0.0
        %729 = vmatpush1.msra.mxu0 0.0
        %730 = vmatprep.subr.mxu0 0.0
        %731 = vmatpush1.msra.mxu0 0.0
        %732 = vmatprep.subr.mxu0 0.0
        %733 = vmatpush1.msra.mxu0 0.0
        %734 = vmatprep.subr.mxu0 0.0
        %735 = vmatpush1.msra.mxu0 0.0
        %736 = vmatprep.subr.mxu0 0.0
        %737 = vmatpush1.msra.mxu0 0.0
        %738 = vmatprep.subr.mxu0 0.0
        %739 = vmatpush1.msra.mxu0 0.0
        %740 = vmatprep.subr.mxu0 0.0
        %741 = vmatpush1.msra.mxu0 0.0
        %742 = vmatprep.mubr.f32.mxu0 0.0
        %743 = vmatmul.mubr.f32.gmra.mrb[0].mxu0 %v676
        %v744 = vpop.f32.mrb[0].mxu0
        %v745 = vadd.f32 0.0, %v744
        %v746 = vpop.f32.mrb[0].mxu0
        %747 = vdwg.mxu0
        %s748 = smul.u32 %s673, 8
        %s749 = scalar_lea.vmem %s249, %s748 [#allocation3]
        %v750 = vld [vmem:[%s749] sm:$0xff]
        %v751 = vadd.f32 %v750, %v745
        %v752 = vxor.u32 %v751, 2147483648
        %v753 = vmul.f32 %v752, 1.442695
        %v754 = vpow.pop %v753
        %v755 = vadd.f32 %v754, 1.0
        %v756 = vrcp.pop %v755
        %v757 = vmul.f32 1.0, %v756
        %v758 = vadd.f32 %v745, %v409
        %760 = vrot.lane.b32.xlu0 %v758, 96
        %v761 = vpop.permute.xlu0 %760
        %v763 = vmul.f32 %v757, %v761
        %765 = vrot.lane.b32.xlu0 %v763, 32
        %v766 = vpop.permute.xlu0 %765
        %v768 = vadd.f32 %v750, %v766
        %v769 = vtanh.pop %v768
        %v770 = vsub.f32 1.0, %v757
        %772 = vrot.lane.b32.xlu0 %v769, 112
        %v773 = vpop.permute.xlu0 %772
        %v775 = vmul.f32 %v770, %v773
        %776 = vrot.lane.b32.xlu0 %v674, 16
        %v777 = vpop.permute.xlu0 %776
        %v779 = vmul.f32 %v757, %v777
        %v780 = vadd.f32 %v775, %v779
        %782 = vrot.lane.b32.xlu0 %v780, 112
        %v783 = vpop.permute.xlu0 %782
        %785 = vst.msk [vmem:[#allocation2] sm:$0xff] %vm319, %v783
        %s786 = scalar_lea.vmem %s297, %s748 [#allocation9]
        %787 = vst.msk [vmem:[%s786] sm:$0xff] %vm319, %v783
        %s788 = ssub.s32 4, %s27
        %v789 = vld [vmem:[#allocation2] sm:$0xff]
        %v791 = vsel %vm319, %v789, 0
        %793 = vmatprep.subr.mxu0 0.0
        %794 = vmatpush1.msra.mxu0 %v314
        %795 = vmatprep.subr.mxu0 0.0
        %796 = vmatpush1.msra.mxu0 %v315
        %797 = vmatprep.subr.mxu0 0.0
        %798 = vmatpush1.msra.mxu0 0.0
        %799 = vmatprep.subr.mxu0 0.0
        %800 = vmatpush1.msra.mxu0 0.0
        %801 = vmatprep.subr.mxu0 0.0
        %802 = vmatpush1.msra.mxu0 0.0
        %803 = vmatprep.subr.mxu0 0.0
        %804 = vmatpush1.msra.mxu0 0.0
        %805 = vmatprep.subr.mxu0 0.0
        %806 = vmatpush1.msra.mxu0 0.0
        %807 = vmatprep.subr.mxu0 0.0
        %808 = vmatpush1.msra.mxu0 0.0
        %809 = vmatprep.subr.mxu0 0.0
        %810 = vmatpush1.msra.mxu0 0.0
        %811 = vmatprep.subr.mxu0 0.0
        %812 = vmatpush1.msra.mxu0 0.0
        %813 = vmatprep.subr.mxu0 0.0
        %814 = vmatpush1.msra.mxu0 0.0
        %815 = vmatprep.subr.mxu0 0.0
        %816 = vmatpush1.msra.mxu0 0.0
        %817 = vmatprep.subr.mxu0 0.0
        %818 = vmatpush1.msra.mxu0 0.0
        %819 = vmatprep.subr.mxu0 0.0
        %820 = vmatpush1.msra.mxu0 0.0
        %821 = vmatprep.subr.mxu0 0.0
        %822 = vmatpush1.msra.mxu0 0.0
        %823 = vmatprep.subr.mxu0 0.0
        %824 = vmatpush1.msra.mxu0 0.0
        %825 = vmatprep.subr.mxu0 0.0
        %826 = vmatpush1.msra.mxu0 0.0
        %827 = vmatprep.subr.mxu0 0.0
        %828 = vmatpush1.msra.mxu0 0.0
        %829 = vmatprep.subr.mxu0 0.0
        %830 = vmatpush1.msra.mxu0 0.0
        %831 = vmatprep.subr.mxu0 0.0
        %832 = vmatpush1.msra.mxu0 0.0
        %833 = vmatprep.subr.mxu0 0.0
        %834 = vmatpush1.msra.mxu0 0.0
        %835 = vmatprep.subr.mxu0 0.0
        %836 = vmatpush1.msra.mxu0 0.0
        %837 = vmatprep.subr.mxu0 0.0
        %838 = vmatpush1.msra.mxu0 0.0
        %839 = vmatprep.subr.mxu0 0.0
        %840 = vmatpush1.msra.mxu0 0.0
        %841 = vmatprep.subr.mxu0 0.0
        %842 = vmatpush1.msra.mxu0 0.0
        %843 = vmatprep.subr.mxu0 0.0
        %844 = vmatpush1.msra.mxu0 0.0
        %845 = vmatprep.subr.mxu0 0.0
        %846 = vmatpush1.msra.mxu0 0.0
        %847 = vmatprep.subr.mxu0 0.0
        %848 = vmatpush1.msra.mxu0 0.0
        %849 = vmatprep.subr.mxu0 0.0
        %850 = vmatpush1.msra.mxu0 0.0
        %851 = vmatprep.subr.mxu0 0.0
        %852 = vmatpush1.msra.mxu0 0.0
        %853 = vmatprep.subr.mxu0 0.0
        %854 = vmatpush1.msra.mxu0 0.0
        %855 = vmatprep.subr.mxu0 0.0
        %856 = vmatpush1.msra.mxu0 0.0
        %857 = vmatprep.mubr.f32.mxu0 0.0
        %858 = vmatmul.mubr.f32.gmra.mrb[0].mxu0 %v791
        %v859 = vpop.f32.mrb[0].mxu0
        %v860 = vadd.f32 0.0, %v859
        %v861 = vpop.f32.mrb[0].mxu0
        %862 = vdwg.mxu0
        %s863 = smul.u32 %s788, 8
        %s864 = scalar_lea.vmem %s249, %s863 [#allocation3]
        %v865 = vld [vmem:[%s864] sm:$0xff]
        %v866 = vadd.f32 %v865, %v860
        %v867 = vxor.u32 %v866, 2147483648
        %v868 = vmul.f32 %v867, 1.442695
        %v869 = vpow.pop %v868
        %v870 = vadd.f32 %v869, 1.0
        %v871 = vrcp.pop %v870
        %v872 = vmul.f32 1.0, %v871
        %v873 = vadd.f32 %v860, %v409
        %875 = vrot.lane.b32.xlu0 %v873, 96
        %v876 = vpop.permute.xlu0 %875
        %v878 = vmul.f32 %v872, %v876
        %880 = vrot.lane.b32.xlu0 %v878, 32
        %v881 = vpop.permute.xlu0 %880
        %v883 = vadd.f32 %v865, %v881
        %v884 = vtanh.pop %v883
        %v885 = vsub.f32 1.0, %v872
        %887 = vrot.lane.b32.xlu0 %v884, 112
        %v888 = vpop.permute.xlu0 %887
        %v890 = vmul.f32 %v885, %v888
        %891 = vrot.lane.b32.xlu0 %v789, 16
        %v892 = vpop.permute.xlu0 %891
        %v894 = vmul.f32 %v872, %v892
        %v895 = vadd.f32 %v890, %v894
        %897 = vrot.lane.b32.xlu0 %v895, 112
        %v898 = vpop.permute.xlu0 %897
        %900 = vst.msk [vmem:[#allocation2] sm:$0xff] %vm319, %v898
        %s901 = scalar_lea.vmem %s297, %s863 [#allocation9]
        %902 = vst.msk [vmem:[%s901] sm:$0xff] %vm319, %v898
        %s903 = smul.u32 %s27, 4294967293
        %s904 = sadd.s32 %s903, 5
        %v905 = vld [vmem:[#allocation2] sm:$0xff]
        %v907 = vsel %vm319, %v905, 0
        %909 = vmatprep.subr.mxu0 0.0
        %910 = vmatpush1.msra.mxu0 %v314
        %911 = vmatprep.subr.mxu0 0.0
        %912 = vmatpush1.msra.mxu0 %v315
        %913 = vmatprep.subr.mxu0 0.0
        %914 = vmatpush1.msra.mxu0 0.0
        %915 = vmatprep.subr.mxu0 0.0
        %916 = vmatpush1.msra.mxu0 0.0
        %917 = vmatprep.subr.mxu0 0.0
        %918 = vmatpush1.msra.mxu0 0.0
        %919 = vmatprep.subr.mxu0 0.0
        %920 = vmatpush1.msra.mxu0 0.0
        %921 = vmatprep.subr.mxu0 0.0
        %922 = vmatpush1.msra.mxu0 0.0
        %923 = vmatprep.subr.mxu0 0.0
        %924 = vmatpush1.msra.mxu0 0.0
        %925 = vmatprep.subr.mxu0 0.0
        %926 = vmatpush1.msra.mxu0 0.0
        %927 = vmatprep.subr.mxu0 0.0
        %928 = vmatpush1.msra.mxu0 0.0
        %929 = vmatprep.subr.mxu0 0.0
        %930 = vmatpush1.msra.mxu0 0.0
        %931 = vmatprep.subr.mxu0 0.0
        %932 = vmatpush1.msra.mxu0 0.0
        %933 = vmatprep.subr.mxu0 0.0
        %934 = vmatpush1.msra.mxu0 0.0
        %935 = vmatprep.subr.mxu0 0.0
        %936 = vmatpush1.msra.mxu0 0.0
        %937 = vmatprep.subr.mxu0 0.0
        %938 = vmatpush1.msra.mxu0 0.0
        %939 = vmatprep.subr.mxu0 0.0
        %940 = vmatpush1.msra.mxu0 0.0
        %941 = vmatprep.subr.mxu0 0.0
        %942 = vmatpush1.msra.mxu0 0.0
        %943 = vmatprep.subr.mxu0 0.0
        %944 = vmatpush1.msra.mxu0 0.0
        %945 = vmatprep.subr.mxu0 0.0
        %946 = vmatpush1.msra.mxu0 0.0
        %947 = vmatprep.subr.mxu0 0.0
        %948 = vmatpush1.msra.mxu0 0.0
        %949 = vmatprep.subr.mxu0 0.0
        %950 = vmatpush1.msra.mxu0 0.0
        %951 = vmatprep.subr.mxu0 0.0
        %952 = vmatpush1.msra.mxu0 0.0
        %953 = vmatprep.subr.mxu0 0.0
        %954 = vmatpush1.msra.mxu0 0.0
        %955 = vmatprep.subr.mxu0 0.0
        %956 = vmatpush1.msra.mxu0 0.0
        %957 = vmatprep.subr.mxu0 0.0
        %958 = vmatpush1.msra.mxu0 0.0
        %959 = vmatprep.subr.mxu0 0.0
        %960 = vmatpush1.msra.mxu0 0.0
        %961 = vmatprep.subr.mxu0 0.0
        %962 = vmatpush1.msra.mxu0 0.0
        %963 = vmatprep.subr.mxu0 0.0
        %964 = vmatpush1.msra.mxu0 0.0
        %965 = vmatprep.subr.mxu0 0.0
        %966 = vmatpush1.msra.mxu0 0.0
        %967 = vmatprep.subr.mxu0 0.0
        %968 = vmatpush1.msra.mxu0 0.0
        %969 = vmatprep.subr.mxu0 0.0
        %970 = vmatpush1.msra.mxu0 0.0
        %971 = vmatprep.subr.mxu0 0.0
        %972 = vmatpush1.msra.mxu0 0.0
        %973 = vmatprep.mubr.f32.mxu0 0.0
        %974 = vmatmul.mubr.f32.gmra.mrb[0].mxu0 %v907
        %v975 = vpop.f32.mrb[0].mxu0
        %v976 = vadd.f32 0.0, %v975
        %v977 = vpop.f32.mrb[0].mxu0
        %978 = vdwg.mxu0
        %s979 = smul.u32 %s904, 8
        %s980 = scalar_lea.vmem %s249, %s979 [#allocation3]
        %v981 = vld [vmem:[%s980] sm:$0xff]
        %v982 = vadd.f32 %v981, %v976
        %v983 = vxor.u32 %v982, 2147483648
        %v984 = vmul.f32 %v983, 1.442695
        %v985 = vpow.pop %v984
        %v986 = vadd.f32 %v985, 1.0
        %v987 = vrcp.pop %v986
        %v988 = vmul.f32 1.0, %v987
        %v989 = vadd.f32 %v976, %v409
        %991 = vrot.lane.b32.xlu0 %v989, 96
        %v992 = vpop.permute.xlu0 %991
        %v994 = vmul.f32 %v988, %v992
        %996 = vrot.lane.b32.xlu0 %v994, 32
        %v997 = vpop.permute.xlu0 %996
        %v999 = vadd.f32 %v981, %v997
        %v1000 = vtanh.pop %v999
        %v1001 = vsub.f32 1.0, %v988
        %1003 = vrot.lane.b32.xlu0 %v1000, 112
        %v1004 = vpop.permute.xlu0 %1003
        %v1006 = vmul.f32 %v1001, %v1004
        %1007 = vrot.lane.b32.xlu0 %v905, 16
        %v1008 = vpop.permute.xlu0 %1007
        %v1010 = vmul.f32 %v988, %v1008
        %v1011 = vadd.f32 %v1006, %v1010
        %1013 = vrot.lane.b32.xlu0 %v1011, 112
        %v1014 = vpop.permute.xlu0 %1013
        %1016 = vst.msk [vmem:[#allocation2] sm:$0xff] %vm319, %v1014
        %s1017 = scalar_lea.vmem %s297, %s979 [#allocation9]
        %1018 = vst.msk [vmem:[%s1017] sm:$0xff] %vm319, %v1014
        %s1019 = smul.u32 %s27, 4294967291
        %s1020 = sadd.s32 %s1019, 6
        %v1021 = vld [vmem:[#allocation2] sm:$0xff]
        %v1023 = vsel %vm319, %v1021, 0
        %1025 = vmatprep.subr.mxu0 0.0
        %1026 = vmatpush1.msra.mxu0 %v314
        %1027 = vmatprep.subr.mxu0 0.0
        %1028 = vmatpush1.msra.mxu0 %v315
        %1029 = vmatprep.subr.mxu0 0.0
        %1030 = vmatpush1.msra.mxu0 0.0
        %1031 = vmatprep.subr.mxu0 0.0
        %1032 = vmatpush1.msra.mxu0 0.0
        %1033 = vmatprep.subr.mxu0 0.0
        %1034 = vmatpush1.msra.mxu0 0.0
        %1035 = vmatprep.subr.mxu0 0.0
        %1036 = vmatpush1.msra.mxu0 0.0
        %1037 = vmatprep.subr.mxu0 0.0
        %1038 = vmatpush1.msra.mxu0 0.0
        %1039 = vmatprep.subr.mxu0 0.0
        %1040 = vmatpush1.msra.mxu0 0.0
        %1041 = vmatprep.subr.mxu0 0.0
        %1042 = vmatpush1.msra.mxu0 0.0
        %1043 = vmatprep.subr.mxu0 0.0
        %1044 = vmatpush1.msra.mxu0 0.0
        %1045 = vmatprep.subr.mxu0 0.0
        %1046 = vmatpush1.msra.mxu0 0.0
        %1047 = vmatprep.subr.mxu0 0.0
        %1048 = vmatpush1.msra.mxu0 0.0
        %1049 = vmatprep.subr.mxu0 0.0
        %1050 = vmatpush1.msra.mxu0 0.0
        %1051 = vmatprep.subr.mxu0 0.0
        %1052 = vmatpush1.msra.mxu0 0.0
        %1053 = vmatprep.subr.mxu0 0.0
        %1054 = vmatpush1.msra.mxu0 0.0
        %1055 = vmatprep.subr.mxu0 0.0
        %1056 = vmatpush1.msra.mxu0 0.0
        %1057 = vmatprep.subr.mxu0 0.0
        %1058 = vmatpush1.msra.mxu0 0.0
        %1059 = vmatprep.subr.mxu0 0.0
        %1060 = vmatpush1.msra.mxu0 0.0
        %1061 = vmatprep.subr.mxu0 0.0
        %1062 = vmatpush1.msra.mxu0 0.0
        %1063 = vmatprep.subr.mxu0 0.0
        %1064 = vmatpush1.msra.mxu0 0.0
        %1065 = vmatprep.subr.mxu0 0.0
        %1066 = vmatpush1.msra.mxu0 0.0
        %1067 = vmatprep.subr.mxu0 0.0
        %1068 = vmatpush1.msra.mxu0 0.0
        %1069 = vmatprep.subr.mxu0 0.0
        %1070 = vmatpush1.msra.mxu0 0.0
        %1071 = vmatprep.subr.mxu0 0.0
        %1072 = vmatpush1.msra.mxu0 0.0
        %1073 = vmatprep.subr.mxu0 0.0
        %1074 = vmatpush1.msra.mxu0 0.0
        %1075 = vmatprep.subr.mxu0 0.0
        %1076 = vmatpush1.msra.mxu0 0.0
        %1077 = vmatprep.subr.mxu0 0.0
        %1078 = vmatpush1.msra.mxu0 0.0
        %1079 = vmatprep.subr.mxu0 0.0
        %1080 = vmatpush1.msra.mxu0 0.0
        %1081 = vmatprep.subr.mxu0 0.0
        %1082 = vmatpush1.msra.mxu0 0.0
        %1083 = vmatprep.subr.mxu0 0.0
        %1084 = vmatpush1.msra.mxu0 0.0
        %1085 = vmatprep.subr.mxu0 0.0
        %1086 = vmatpush1.msra.mxu0 0.0
        %1087 = vmatprep.subr.mxu0 0.0
        %1088 = vmatpush1.msra.mxu0 0.0
        %1089 = vmatprep.mubr.f32.mxu0 0.0
        %1090 = vmatmul.mubr.f32.gmra.mrb[0].mxu0 %v1023
        %v1091 = vpop.f32.mrb[0].mxu0
        %v1092 = vadd.f32 0.0, %v1091
        %v1093 = vpop.f32.mrb[0].mxu0
        %1094 = vdwg.mxu0
        %s1095 = smul.u32 %s1020, 8
        %s1096 = scalar_lea.vmem %s249, %s1095 [#allocation3]
        %v1097 = vld [vmem:[%s1096] sm:$0xff]
        %v1098 = vadd.f32 %v1097, %v1092
        %v1099 = vxor.u32 %v1098, 2147483648
        %v1100 = vmul.f32 %v1099, 1.442695
        %v1101 = vpow.pop %v1100
        %v1102 = vadd.f32 %v1101, 1.0
        %v1103 = vrcp.pop %v1102
        %v1104 = vmul.f32 1.0, %v1103
        %v1105 = vadd.f32 %v1092, %v409
        %1107 = vrot.lane.b32.xlu0 %v1105, 96
        %v1108 = vpop.permute.xlu0 %1107
        %v1110 = vmul.f32 %v1104, %v1108
        %1112 = vrot.lane.b32.xlu0 %v1110, 32
        %v1113 = vpop.permute.xlu0 %1112
        %v1115 = vadd.f32 %v1097, %v1113
        %v1116 = vtanh.pop %v1115
        %v1117 = vsub.f32 1.0, %v1104
        %1119 = vrot.lane.b32.xlu0 %v1116, 112
        %v1120 = vpop.permute.xlu0 %1119
        %v1122 = vmul.f32 %v1117, %v1120
        %1123 = vrot.lane.b32.xlu0 %v1021, 16
        %v1124 = vpop.permute.xlu0 %1123
        %v1126 = vmul.f32 %v1104, %v1124
        %v1127 = vadd.f32 %v1122, %v1126
        %1129 = vrot.lane.b32.xlu0 %v1127, 112
        %v1130 = vpop.permute.xlu0 %1129
        %1132 = vst.msk [vmem:[#allocation2] sm:$0xff] %vm319, %v1130
        %s1133 = scalar_lea.vmem %s297, %s1095 [#allocation9]
        %1134 = vst.msk [vmem:[%s1133] sm:$0xff] %vm319, %v1130
        %s1135 = smul.u32 %s27, 4294967289
        %s1136 = sadd.s32 %s1135, 7
        %v1137 = vld [vmem:[#allocation2] sm:$0xff]
        %v1139 = vsel %vm319, %v1137, 0
        %1141 = vmatprep.subr.mxu0 0.0
        %1142 = vmatpush1.msra.mxu0 %v314
        %1143 = vmatprep.subr.mxu0 0.0
        %1144 = vmatpush1.msra.mxu0 %v315
        %1145 = vmatprep.subr.mxu0 0.0
        %1146 = vmatpush1.msra.mxu0 0.0
        %1147 = vmatprep.subr.mxu0 0.0
        %1148 = vmatpush1.msra.mxu0 0.0
        %1149 = vmatprep.subr.mxu0 0.0
        %1150 = vmatpush1.msra.mxu0 0.0
        %1151 = vmatprep.subr.mxu0 0.0
        %1152 = vmatpush1.msra.mxu0 0.0
        %1153 = vmatprep.subr.mxu0 0.0
        %1154 = vmatpush1.msra.mxu0 0.0
        %1155 = vmatprep.subr.mxu0 0.0
        %1156 = vmatpush1.msra.mxu0 0.0
        %1157 = vmatprep.subr.mxu0 0.0
        %1158 = vmatpush1.msra.mxu0 0.0
        %1159 = vmatprep.subr.mxu0 0.0
        %1160 = vmatpush1.msra.mxu0 0.0
        %1161 = vmatprep.subr.mxu0 0.0
        %1162 = vmatpush1.msra.mxu0 0.0
        %1163 = vmatprep.subr.mxu0 0.0
        %1164 = vmatpush1.msra.mxu0 0.0
        %1165 = vmatprep.subr.mxu0 0.0
        %1166 = vmatpush1.msra.mxu0 0.0
        %1167 = vmatprep.subr.mxu0 0.0
        %1168 = vmatpush1.msra.mxu0 0.0
        %1169 = vmatprep.subr.mxu0 0.0
        %1170 = vmatpush1.msra.mxu0 0.0
        %1171 = vmatprep.subr.mxu0 0.0
        %1172 = vmatpush1.msra.mxu0 0.0
        %1173 = vmatprep.subr.mxu0 0.0
        %1174 = vmatpush1.msra.mxu0 0.0
        %1175 = vmatprep.subr.mxu0 0.0
        %1176 = vmatpush1.msra.mxu0 0.0
        %1177 = vmatprep.subr.mxu0 0.0
        %1178 = vmatpush1.msra.mxu0 0.0
        %1179 = vmatprep.subr.mxu0 0.0
        %1180 = vmatpush1.msra.mxu0 0.0
        %1181 = vmatprep.subr.mxu0 0.0
        %1182 = vmatpush1.msra.mxu0 0.0
        %1183 = vmatprep.subr.mxu0 0.0
        %1184 = vmatpush1.msra.mxu0 0.0
        %1185 = vmatprep.subr.mxu0 0.0
        %1186 = vmatpush1.msra.mxu0 0.0
        %1187 = vmatprep.subr.mxu0 0.0
        %1188 = vmatpush1.msra.mxu0 0.0
        %1189 = vmatprep.subr.mxu0 0.0
        %1190 = vmatpush1.msra.mxu0 0.0
        %1191 = vmatprep.subr.mxu0 0.0
        %1192 = vmatpush1.msra.mxu0 0.0
        %1193 = vmatprep.subr.mxu0 0.0
        %1194 = vmatpush1.msra.mxu0 0.0
        %1195 = vmatprep.subr.mxu0 0.0
        %1196 = vmatpush1.msra.mxu0 0.0
        %1197 = vmatprep.subr.mxu0 0.0
        %1198 = vmatpush1.msra.mxu0 0.0
        %1199 = vmatprep.subr.mxu0 0.0
        %1200 = vmatpush1.msra.mxu0 0.0
        %1201 = vmatprep.subr.mxu0 0.0
        %1202 = vmatpush1.msra.mxu0 0.0
        %1203 = vmatprep.subr.mxu0 0.0
        %1204 = vmatpush1.msra.mxu0 0.0
        %1205 = vmatprep.mubr.f32.mxu0 0.0
        %1206 = vmatmul.mubr.f32.gmra.mrb[0].mxu0 %v1139
        %v1207 = vpop.f32.mrb[0].mxu0
        %v1208 = vadd.f32 0.0, %v1207
        %v1209 = vpop.f32.mrb[0].mxu0
        %1210 = vdwg.mxu0
        %s1211 = smul.u32 %s1136, 8
        %s1212 = scalar_lea.vmem %s249, %s1211 [#allocation3]
        %v1213 = vld [vmem:[%s1212] sm:$0xff]
        %v1214 = vadd.f32 %v1213, %v1208
        %v1215 = vxor.u32 %v1214, 2147483648
        %v1216 = vmul.f32 %v1215, 1.442695
        %v1217 = vpow.pop %v1216
        %v1218 = vadd.f32 %v1217, 1.0
        %v1219 = vrcp.pop %v1218
        %v1220 = vmul.f32 1.0, %v1219
        %v1221 = vadd.f32 %v1208, %v409
        %1223 = vrot.lane.b32.xlu0 %v1221, 96
        %v1224 = vpop.permute.xlu0 %1223
        %v1226 = vmul.f32 %v1220, %v1224
        %1228 = vrot.lane.b32.xlu0 %v1226, 32
        %v1229 = vpop.permute.xlu0 %1228
        %v1231 = vadd.f32 %v1213, %v1229
        %v1232 = vtanh.pop %v1231
        %v1233 = vsub.f32 1.0, %v1220
        %1235 = vrot.lane.b32.xlu0 %v1232, 112
        %v1236 = vpop.permute.xlu0 %1235
        %v1238 = vmul.f32 %v1233, %v1236
        %1239 = vrot.lane.b32.xlu0 %v1137, 16
        %v1240 = vpop.permute.xlu0 %1239
        %v1242 = vmul.f32 %v1220, %v1240
        %v1243 = vadd.f32 %v1238, %v1242
        %1245 = vrot.lane.b32.xlu0 %v1243, 112
        %v1246 = vpop.permute.xlu0 %1245
        %1248 = vst.msk [vmem:[#allocation2] sm:$0xff] %vm319, %v1246
        %s1249 = scalar_lea.vmem %s297, %s1211 [#allocation9]
        %1250 = vst.msk [vmem:[%s1249] sm:$0xff] %vm319, %v1246
        %s1251 = sand.u32 %s141, 1
        %s1252 = scalar_lea.sflag [#allocation5], %s1251
        %s1253 = sand.u32 %s141, 1
        %s1254 = smul.addr %s1253, 64
        %s1255 = scalar_lea.vmem [#allocation9], %s1254
        // Predicated region
        $region49: #{gru_encoder_forward.5} parent=31 // pred_check
          %p1256 = pneg %p151
        $region50: #{gru_encoder_forward.5} parent=31 // pred_check_branch
          %1258 = sbr.rel (%p1256) target = $region52
        $region51: #{gru_encoder_forward.5} parent=31 // pred_region
          %s1259 = smul.u32 %s28, 2
          %s1260 = ssub.s32 0, %s1259
          %s1261 = smul.u32 %s27, %s1260
          %s1262 = sadd.s32 %s28, %s1261
          %s1263 = smul.u32 8, %s1262
          %s1265 = ssub.s32 1024, 1024
          %1266 = vsyncadd %s1252, %s1265
          %s1267 = smul.addr %s27, 8
          %s1268 = sadd.s32 %s1263, %s1267
          %s1269 = smul.addr %s1268, 128
          %s1270 = scalar_lea.hbm %s3, %s1269
          %s1271 = sshll.u32 %s1255, 4
          %s1272 = int_to_ptr.vmem [resolvable:$true] %s1271
          %1277 = dma.vmem_to_hbm [thread:$0]  %s1272, 1024, %s1270, %s1252, 128, 128, 8
        $region52: #{gru_encoder_forward.5} parent=31 // pred_fallthru
          _
      $region32: #{gru_encoder_forward.5} parent=5 // pred_fallthru
        _
      %p1278 = scmp.le.s32.totalorder 2, %s18
      // Predicated region
      $region53: #{gru_encoder_forward.5} parent=5 // pred_check
        %p1279 = pneg %p1278
      $region54: #{gru_encoder_forward.5} parent=5 // pred_check_branch
        %1281 = sbr.rel (%p1279) target = $region56
      $region55: #{gru_encoder_forward.5} parent=5 // pred_region
        %s1282 = ssub.s32 %s18, 2
        // Predicated region
        $region57: #{gru_encoder_forward.5} parent=55 // pred_check
          %p1283 = pneg %p157
        $region58: #{gru_encoder_forward.5} parent=55 // pred_check_branch
          %1285 = sbr.rel (%p1283) target = $region60
        $region59: #{gru_encoder_forward.5} parent=55 // pred_region
          %s1286 = sand.u32 %s142, 1
          %s1287 = scalar_lea.sflag [#allocation5], %s1286
          %s1288 = sand.u32 %s142, 1
          %s1289 = smul.addr %s1288, 64
          %s1290 = scalar_lea.vmem [#allocation9], %s1289
          %1291 = dma.done %s1287, 1024
        $region60: #{gru_encoder_forward.5} parent=55 // pred_fallthru
          _
      $region56: #{gru_encoder_forward.5} parent=5 // pred_fallthru
        _
    $region6: #{gru_encoder_forward.5} parent=1 // loop_footer
      %s22 = sadd.s32 1, %s18
    $region7: #{gru_encoder_forward.5} parent=1 // loop_footer_branch
      %17 = sbr.rel target = $region3
    $region8: #{gru_encoder_forward.5} parent=1 // loop_exit
      _
    %1292 = vsyncpa [#allocation4], 1
    %s1293 = scalar_lea.sflag [#allocation4], 1
    %1294 = vsyncpa %s1293, 1
    %1295 = vsyncpa [#allocation7], 1
    %s1296 = scalar_lea.sflag [#allocation7], 1
    %1297 = vsyncpa %s1296, 1
    %1298 = vsyncpa [#allocation5], 1
    %s1299 = scalar_lea.sflag [#allocation5], 1
    %1300 = vsyncpa %s1299, 1

</llo_original>
